<compile_context>
chip_gen: v7x
topology: tpu7x:2x2x1
jax: 0.10.0
libtpu: 0.0.40
codegen_flags: <defaults>
</compile_context>

<pallas_src>
import functools

import jax
import jax.numpy as jnp
from jax import lax
from jax.experimental import pallas as pl
from jax.experimental.pallas import tpu as pltpu

LN_EPS = 1e-5   # nn.LayerNorm default


def _sigmoid(z):
    return 1.0 / (1.0 + jnp.exp(-z))


def _la_kernel(x_ref, y_ref, lnw_ref, lnb_ref, wqkv_ref, bqkv_ref,
               wp_ref, bp_ref, o_ref, *, num_heads, scale):
    # x_ref / y_ref : VMEM (1, N, C)   tokens-major, channels on the lane axis
    # lnw/lnb       : VMEM (1, C)      LayerNorm affine
    # wqkv_ref      : VMEM (C, 3C)     [Wq^T | Wkv^T]   (in x out)
    # bqkv_ref      : VMEM (1, 3C)     [bq   | bkv]
    # wp_ref        : VMEM (C, C)      proj weight, transposed (in x out)
    # bp_ref        : VMEM (1, C)
    x = x_ref[0]                       # (N, C) f32
    yb = y_ref[0]                      # (N, C) f32
    N, C = x.shape
    d = C // num_heads

    # ---- LayerNorm(y) over the channel (lane) axis -------------------------
    mu = jnp.mean(yb, axis=-1, keepdims=True)
    var = jnp.mean((yb - mu) * (yb - mu), axis=-1, keepdims=True)
    y2 = (yb - mu) * lax.rsqrt(var + LN_EPS) * lnw_ref[...] + lnb_ref[...]

    # ---- one fused projection matmul for {q, kv} of {x, y2} -----------------
    # stacked (2N, C) @ wqkv (C, 3C) replaces 4 separate small matmuls.
    stacked = jnp.concatenate([x, y2], axis=0)                       # (2N, C)
    z = jnp.dot(stacked, wqkv_ref[...],
                preferred_element_type=jnp.float32) + bqkv_ref[...]  # (2N, 3C)
    zx = z[:N]                       # [q0 | kv0]        (N, 3C)
    g = _sigmoid(z[N:])              # [yq | ykv] gates  (N, 3C)

    # lane-masked gating (single VPU expression, no lane slices):
    #   q columns  (lane <  C): zx*g + zx = q0*(1+yq)
    #   kv columns (lane >= C): zx*g + g  = (kv0+1)*ykv
    col = lax.broadcasted_iota(jnp.int32, (N, 3 * C), 1)
    qkv = zx * g + jnp.where(col < C, zx, g)       # (N, 3C) = [q | k | v]

    # ---- per-head softmax attention, proj fused into the head loop ---------
    acc = jnp.zeros((N, C), jnp.float32)
    for h in range(num_heads):
        lo = h * d
        qh = qkv[:, lo:lo + d]                     # (N, d)
        kh = qkv[:, C + lo:C + lo + d]             # (N, d)
        vh = qkv[:, 2 * C + lo:2 * C + lo + d]     # (N, d)
        # q @ k^T without materializing a transposed array
        s = lax.dot_general(qh, kh, (((1,), (1,)), ((), ())),
                            preferred_element_type=jnp.float32) * scale
        s = s - jnp.max(s, axis=-1, keepdims=True)
        e = jnp.exp(s)
        p = e / jnp.sum(e, axis=-1, keepdims=True)           # softmax (N, N)
        oh = jnp.dot(p, vh, preferred_element_type=jnp.float32)       # (N, d)
        # fused output projection:  sum_h  oh @ Wp^T[h*d:(h+1)*d, :]
        acc = acc + jnp.dot(oh, wp_ref[lo:lo + d, :],
                            preferred_element_type=jnp.float32)
    out = acc + bp_ref[...]

    o_ref[0] = out.astype(o_ref.dtype)


def la_forward(x, y, ln_w, ln_b, wq, bq, wkv, bkv, wp, bp, *,
               num_heads, qk_scale=None):
    """x: (B, N, C); y: (B, C, H, W) with H*W == N.  PyTorch-layout weights:
    wq (C, C), wkv (2C, C), wp (C, C), biases 1-D, LayerNorm affine 1-D."""
    B, N, C = x.shape
    assert C % num_heads == 0
    head_dim = C // num_heads
    scale = float(qk_scale) if qk_scale is not None else float(head_dim) ** -0.5

    f32 = jnp.float32
    # Layout plumbing outside the kernel: y -> tokens-major (B, N, C)
    y_t = jnp.transpose(y.reshape(B, C, -1), (0, 2, 1)).astype(f32)

    # Fuse q and kv weights into one (C, 3C) operand (in x out layout).
    wqkv_t = jnp.concatenate([wq.T, wkv.T], axis=1).astype(f32)     # (C, 3C)
    bqkv_2 = jnp.concatenate([bq, bkv]).reshape(1, 3 * C).astype(f32)
    wp_t = wp.T.astype(f32)                                         # (C, C)
    bp_2 = bp.reshape(1, C).astype(f32)
    lnw_2 = ln_w.reshape(1, C).astype(f32)
    lnb_2 = ln_b.reshape(1, C).astype(f32)

    kernel = functools.partial(_la_kernel, num_heads=num_heads, scale=scale)
    const2 = lambda b: (0, 0)

    return pl.pallas_call(
        kernel,
        out_shape=jax.ShapeDtypeStruct((B, N, C), jnp.float32),
        grid_spec=pltpu.PrefetchScalarGridSpec(
            num_scalar_prefetch=0,
            grid=(B,),
            in_specs=[
                pl.BlockSpec((1, N, C), lambda b: (b, 0, 0)),   # x
                pl.BlockSpec((1, N, C), lambda b: (b, 0, 0)),   # y (tokens)
                pl.BlockSpec((1, C), const2),                   # LN weight
                pl.BlockSpec((1, C), const2),                   # LN bias
                pl.BlockSpec((C, 3 * C), const2),               # [Wq^T | Wkv^T]
                pl.BlockSpec((1, 3 * C), const2),               # [bq | bkv]
                pl.BlockSpec((C, C), const2),                   # Wproj^T
                pl.BlockSpec((1, C), const2),                   # bproj
            ],
            out_specs=pl.BlockSpec((1, N, C), lambda b: (b, 0, 0)),
        ),
        compiler_params=pltpu.CompilerParams(
            dimension_semantics=("parallel",)),
    )(x.astype(f32), y_t, lnw_2, lnb_2, wqkv_t, bqkv_2, wp_t, bp_2)


def _reference(x, y, ln_w, ln_b, wq, bq, wkv, bkv, wp, bp, num_heads):
    """Plain-JAX replication of the PyTorch LA.forward (sr_ratio=1)."""
    B, N, C = x.shape
    d = C // num_heads
    scale = float(d) ** -0.5
    y1 = jnp.transpose(y.reshape(B, C, -1), (0, 2, 1))
    mu = jnp.mean(y1, axis=-1, keepdims=True)
    var = jnp.mean((y1 - mu) ** 2, axis=-1, keepdims=True)
    y2 = (y1 - mu) / jnp.sqrt(var + LN_EPS) * ln_w + ln_b
    yq = jax.nn.sigmoid(y2 @ wq.T + bq)
    ykv = jax.nn.sigmoid(y2 @ wkv.T + bkv)
    q0 = x @ wq.T + bq
    q2 = q0 + q0 * yq
    kv0 = x @ wkv.T + bkv
    kv2 = kv0 * ykv + ykv
    q = q2.reshape(B, N, num_heads, d).transpose(0, 2, 1, 3)
    kv = kv2.reshape(B, N, 2, num_heads, d).transpose(2, 0, 3, 1, 4)
    k, v = kv[0], kv[1]
    attn = jnp.einsum('bhnd,bhmd->bhnm', q, k) * scale
    attn = jax.nn.softmax(attn, axis=-1)
    out = jnp.einsum('bhnm,bhmd->bhnd', attn, v)
    out = out.transpose(0, 2, 1, 3).reshape(B, N, C)
    return out @ wp.T + bp


if __name__ == "__main__":
    B, dim, num_heads, H, W = 2, 32, 4, 8, 8
    N = H * W
    key = jax.random.PRNGKey(0)
    ks = jax.random.split(key, 10)

    x = jax.random.normal(ks[0], (B, N, dim), dtype=jnp.float32)
    y = jax.random.normal(ks[1], (B, dim, H, W), dtype=jnp.float32)

    s = 1.0 / float(dim) ** 0.5
    wq = jax.random.normal(ks[2], (dim, dim), jnp.float32) * s       # (out, in)
    bq = jax.random.normal(ks[3], (dim,), jnp.float32) * 0.1
    wkv = jax.random.normal(ks[4], (2 * dim, dim), jnp.float32) * s
    bkv = jax.random.normal(ks[5], (2 * dim,), jnp.float32) * 0.1
    wp = jax.random.normal(ks[6], (dim, dim), jnp.float32) * s
    bp = jax.random.normal(ks[7], (dim,), jnp.float32) * 0.1
    ln_w = 1.0 + 0.1 * jax.random.normal(ks[8], (dim,), jnp.float32)
    ln_b = 0.1 * jax.random.normal(ks[9], (dim,), jnp.float32)

    out = la_forward(x, y, ln_w, ln_b, wq, bq, wkv, bkv, wp, bp,
                     num_heads=num_heads)
    out = jax.block_until_ready(out)

    ref = _reference(x, y, ln_w, ln_b, wq, bq, wkv, bkv, wp, bp, num_heads)
    assert out.shape == (B, N, dim)
    err = jnp.max(jnp.abs(out - ref))
    assert jnp.allclose(out, ref, atol=2e-4, rtol=2e-4), f"max err {err}"
    print("KERNEL_OK")
</pallas_src>

<mosaic_0001>
module attributes {stable_mosaic.version = 11 : i64} {
  func.func @_la_kernel(%arg0: i32, %arg1: memref<1x64x32xf32, #tpu.memory_space<vmem>>, %arg2: memref<1x64x32xf32, #tpu.memory_space<vmem>>, %arg3: memref<1x32xf32, #tpu.memory_space<vmem>>, %arg4: memref<1x32xf32, #tpu.memory_space<vmem>>, %arg5: memref<32x96xf32, #tpu.memory_space<vmem>>, %arg6: memref<1x96xf32, #tpu.memory_space<vmem>>, %arg7: memref<32x32xf32, #tpu.memory_space<vmem>>, %arg8: memref<1x32xf32, #tpu.memory_space<vmem>>, %arg9: memref<1x64x32xf32, #tpu.memory_space<vmem>>) attributes {dimension_semantics = [#tpu.dimension_semantics<parallel>], iteration_bounds = array<i64: 2>, scalar_prefetch = 0 : i64, scratch_operands = 0 : i64, tpu.core_type = #tpu.core_type<tc>, window_params = [{transform_indices = @transform_0, window_bounds = array<i64: 1, 64, 32>}, {transform_indices = @transform_1, window_bounds = array<i64: 1, 64, 32>}, {pipeline_mode = #tpu.pipeline_mode<synchronous>, transform_indices = @transform_2, window_bounds = array<i64: 1, 32>}, {pipeline_mode = #tpu.pipeline_mode<synchronous>, transform_indices = @transform_3, window_bounds = array<i64: 1, 32>}, {pipeline_mode = #tpu.pipeline_mode<synchronous>, transform_indices = @transform_4, window_bounds = array<i64: 32, 96>}, {pipeline_mode = #tpu.pipeline_mode<synchronous>, transform_indices = @transform_5, window_bounds = array<i64: 1, 96>}, {pipeline_mode = #tpu.pipeline_mode<synchronous>, transform_indices = @transform_6, window_bounds = array<i64: 32, 32>}, {pipeline_mode = #tpu.pipeline_mode<synchronous>, transform_indices = @transform_7, window_bounds = array<i64: 1, 32>}, {transform_indices = @transform_8, window_bounds = array<i64: 1, 64, 32>}]} {
    %c0 = arith.constant 0 : index
    %c0_0 = arith.constant 0 : index
    %c0_1 = arith.constant 0 : index
    %0 = vector.load %arg1[%c0, %c0_0, %c0_1] : memref<1x64x32xf32, #tpu.memory_space<vmem>>, vector<1x64x32xf32>
    %1 = vector.shape_cast %0 : vector<1x64x32xf32> to vector<64x32xf32>
    %c0_2 = arith.constant 0 : index
    %c0_3 = arith.constant 0 : index
    %c0_4 = arith.constant 0 : index
    %2 = vector.load %arg2[%c0_2, %c0_3, %c0_4] : memref<1x64x32xf32, #tpu.memory_space<vmem>>, vector<1x64x32xf32>
    %3 = vector.shape_cast %2 : vector<1x64x32xf32> to vector<64x32xf32>
    %cst = arith.constant dense<0.000000e+00> : vector<64xf32>
    %4 = vector.multi_reduction <add>, %3, %cst [1] : vector<64x32xf32> to vector<64xf32>
    %5 = vector.shape_cast %4 : vector<64xf32> to vector<64x1xf32>
    %cst_5 = arith.constant 3.200000e+01 : f32
    %6 = vector.broadcast %cst_5 : f32 to vector<64x1xf32>
    %7 = arith.divf %5, %6 : vector<64x1xf32>
    %8 = vector.broadcast %7 : vector<64x1xf32> to vector<64x32xf32>
    %9 = arith.subf %3, %8 : vector<64x32xf32>
    %10 = vector.broadcast %7 : vector<64x1xf32> to vector<64x32xf32>
    %11 = arith.subf %3, %10 : vector<64x32xf32>
    %12 = arith.mulf %9, %11 : vector<64x32xf32>
    %cst_6 = arith.constant dense<0.000000e+00> : vector<64xf32>
    %13 = vector.multi_reduction <add>, %12, %cst_6 [1] : vector<64x32xf32> to vector<64xf32>
    %14 = vector.shape_cast %13 : vector<64xf32> to vector<64x1xf32>
    %cst_7 = arith.constant 3.200000e+01 : f32
    %15 = vector.broadcast %cst_7 : f32 to vector<64x1xf32>
    %16 = arith.divf %14, %15 : vector<64x1xf32>
    %17 = vector.broadcast %7 : vector<64x1xf32> to vector<64x32xf32>
    %18 = arith.subf %3, %17 : vector<64x32xf32>
    %cst_8 = arith.constant 9.99999974E-6 : f32
    %19 = vector.broadcast %cst_8 : f32 to vector<64x1xf32>
    %20 = arith.addf %16, %19 : vector<64x1xf32>
    %21 = math.rsqrt %20 : vector<64x1xf32>
    %22 = vector.broadcast %21 : vector<64x1xf32> to vector<64x32xf32>
    %23 = arith.mulf %18, %22 : vector<64x32xf32>
    %c0_9 = arith.constant 0 : index
    %c0_10 = arith.constant 0 : index
    %24 = vector.load %arg3[%c0_9, %c0_10] : memref<1x32xf32, #tpu.memory_space<vmem>>, vector<1x32xf32>
    %25 = vector.broadcast %24 : vector<1x32xf32> to vector<64x32xf32>
    %26 = arith.mulf %23, %25 : vector<64x32xf32>
    %c0_11 = arith.constant 0 : index
    %c0_12 = arith.constant 0 : index
    %27 = vector.load %arg4[%c0_11, %c0_12] : memref<1x32xf32, #tpu.memory_space<vmem>>, vector<1x32xf32>
    %28 = vector.broadcast %27 : vector<1x32xf32> to vector<64x32xf32>
    %29 = arith.addf %26, %28 : vector<64x32xf32>
    %30 = tpu.concatenate %1, %29 in 0 : vector<64x32xf32>, vector<64x32xf32> -> vector<128x32xf32>
    %c0_13 = arith.constant 0 : index
    %c0_14 = arith.constant 0 : index
    %31 = vector.load %arg5[%c0_13, %c0_14] : memref<32x96xf32, #tpu.memory_space<vmem>>, vector<32x96xf32>
    %cst_15 = arith.constant dense<0.000000e+00> : vector<128x96xf32>
    %32 = tpu.matmul %30, %31, %cst_15 {dimension_numbers = #tpu.dot_dimension_numbers<[1], [0], [0], [1], [0, 0, 1, 1], [], []>} : vector<128x32xf32>, vector<32x96xf32>, vector<128x96xf32> -> vector<128x96xf32>
    %c0_16 = arith.constant 0 : index
    %c0_17 = arith.constant 0 : index
    %33 = vector.load %arg6[%c0_16, %c0_17] : memref<1x96xf32, #tpu.memory_space<vmem>>, vector<1x96xf32>
    %34 = vector.broadcast %33 : vector<1x96xf32> to vector<128x96xf32>
    %35 = arith.addf %32, %34 : vector<128x96xf32>
    %36 = vector.extract_strided_slice %35 {offsets = [0, 0], sizes = [64, 96], strides = [1, 1]} : vector<128x96xf32> to vector<64x96xf32>
    %37 = vector.extract_strided_slice %35 {offsets = [64, 0], sizes = [64, 96], strides = [1, 1]} : vector<128x96xf32> to vector<64x96xf32>
    %cst_18 = arith.constant 0.000000e+00 : f32
    %38 = vector.broadcast %cst_18 : f32 to vector<64x96xf32>
    %39 = arith.subf %38, %37 : vector<64x96xf32>
    %40 = math.exp %39 : vector<64x96xf32>
    %cst_19 = arith.constant 1.000000e+00 : f32
    %41 = vector.broadcast %cst_19 : f32 to vector<64x96xf32>
    %42 = arith.addf %41, %40 : vector<64x96xf32>
    %cst_20 = arith.constant 1.000000e+00 : f32
    %43 = vector.broadcast %cst_20 : f32 to vector<64x96xf32>
    %44 = arith.divf %43, %42 : vector<64x96xf32>
    %45 = tpu.iota {dimensions = array<i32: 1>} : vector<64x96xi32>
    %46 = arith.mulf %36, %44 : vector<64x96xf32>
    %c32_i32 = arith.constant 32 : i32
    %47 = vector.broadcast %c32_i32 : i32 to vector<64x96xi32>
    %48 = arith.cmpi slt, %45, %47 : vector<64x96xi32>
    %49 = arith.select %48, %36, %44 : vector<64x96xi1>, vector<64x96xf32>
    %50 = arith.addf %46, %49 : vector<64x96xf32>
    %cst_21 = arith.constant 0.000000e+00 : f32
    %51 = vector.broadcast %cst_21 : f32 to vector<64x32xf32>
    %52 = vector.extract_strided_slice %50 {offsets = [0, 0], sizes = [64, 8], strides = [1, 1]} : vector<64x96xf32> to vector<64x8xf32>
    %53 = vector.extract_strided_slice %50 {offsets = [0, 32], sizes = [64, 8], strides = [1, 1]} : vector<64x96xf32> to vector<64x8xf32>
    %54 = vector.extract_strided_slice %50 {offsets = [0, 64], sizes = [64, 8], strides = [1, 1]} : vector<64x96xf32> to vector<64x8xf32>
    %cst_22 = arith.constant dense<0.000000e+00> : vector<64x64xf32>
    %55 = tpu.matmul %52, %53, %cst_22 {dimension_numbers = #tpu.dot_dimension_numbers<[1], [1], [0], [0], [0, 0, 1, 0], [], []>} : vector<64x8xf32>, vector<64x8xf32>, vector<64x64xf32> -> vector<64x64xf32>
    %cst_23 = arith.constant 0.353553385 : f32
    %56 = vector.broadcast %cst_23 : f32 to vector<64x64xf32>
    %57 = arith.mulf %55, %56 : vector<64x64xf32>
    %cst_24 = arith.constant dense<0xFF800000> : vector<64xf32>
    %58 = vector.multi_reduction <maximumf>, %57, %cst_24 [1] : vector<64x64xf32> to vector<64xf32>
    %59 = vector.shape_cast %58 : vector<64xf32> to vector<64x1xf32>
    %60 = vector.broadcast %59 : vector<64x1xf32> to vector<64x64xf32>
    %61 = arith.subf %57, %60 : vector<64x64xf32>
    %62 = math.exp %61 : vector<64x64xf32>
    %cst_25 = arith.constant dense<0.000000e+00> : vector<64xf32>
    %63 = vector.multi_reduction <add>, %62, %cst_25 [1] : vector<64x64xf32> to vector<64xf32>
    %64 = vector.shape_cast %63 : vector<64xf32> to vector<64x1xf32>
    %65 = vector.broadcast %64 : vector<64x1xf32> to vector<64x64xf32>
    %66 = arith.divf %62, %65 : vector<64x64xf32>
    %cst_26 = arith.constant dense<0.000000e+00> : vector<64x8xf32>
    %67 = tpu.matmul %66, %54, %cst_26 {dimension_numbers = #tpu.dot_dimension_numbers<[1], [0], [0], [1], [0, 0, 1, 1], [], []>} : vector<64x64xf32>, vector<64x8xf32>, vector<64x8xf32> -> vector<64x8xf32>
    %c0_27 = arith.constant 0 : index
    %c0_28 = arith.constant 0 : index
    %68 = vector.load %arg7[%c0_27, %c0_28] : memref<32x32xf32, #tpu.memory_space<vmem>>, vector<8x32xf32>
    %cst_29 = arith.constant dense<0.000000e+00> : vector<64x32xf32>
    %69 = tpu.matmul %67, %68, %cst_29 {dimension_numbers = #tpu.dot_dimension_numbers<[1], [0], [0], [1], [0, 0, 1, 1], [], []>} : vector<64x8xf32>, vector<8x32xf32>, vector<64x32xf32> -> vector<64x32xf32>
    %70 = arith.addf %51, %69 : vector<64x32xf32>
    %71 = vector.extract_strided_slice %50 {offsets = [0, 8], sizes = [64, 8], strides = [1, 1]} : vector<64x96xf32> to vector<64x8xf32>
    %72 = vector.extract_strided_slice %50 {offsets = [0, 40], sizes = [64, 8], strides = [1, 1]} : vector<64x96xf32> to vector<64x8xf32>
    %73 = vector.extract_strided_slice %50 {offsets = [0, 72], sizes = [64, 8], strides = [1, 1]} : vector<64x96xf32> to vector<64x8xf32>
    %cst_30 = arith.constant dense<0.000000e+00> : vector<64x64xf32>
    %74 = tpu.matmul %71, %72, %cst_30 {dimension_numbers = #tpu.dot_dimension_numbers<[1], [1], [0], [0], [0, 0, 1, 0], [], []>} : vector<64x8xf32>, vector<64x8xf32>, vector<64x64xf32> -> vector<64x64xf32>
    %cst_31 = arith.constant 0.353553385 : f32
    %75 = vector.broadcast %cst_31 : f32 to vector<64x64xf32>
    %76 = arith.mulf %74, %75 : vector<64x64xf32>
    %cst_32 = arith.constant dense<0xFF800000> : vector<64xf32>
    %77 = vector.multi_reduction <maximumf>, %76, %cst_32 [1] : vector<64x64xf32> to vector<64xf32>
    %78 = vector.shape_cast %77 : vector<64xf32> to vector<64x1xf32>
    %79 = vector.broadcast %78 : vector<64x1xf32> to vector<64x64xf32>
    %80 = arith.subf %76, %79 : vector<64x64xf32>
    %81 = math.exp %80 : vector<64x64xf32>
    %cst_33 = arith.constant dense<0.000000e+00> : vector<64xf32>
    %82 = vector.multi_reduction <add>, %81, %cst_33 [1] : vector<64x64xf32> to vector<64xf32>
    %83 = vector.shape_cast %82 : vector<64xf32> to vector<64x1xf32>
    %84 = vector.broadcast %83 : vector<64x1xf32> to vector<64x64xf32>
    %85 = arith.divf %81, %84 : vector<64x64xf32>
    %cst_34 = arith.constant dense<0.000000e+00> : vector<64x8xf32>
    %86 = tpu.matmul %85, %73, %cst_34 {dimension_numbers = #tpu.dot_dimension_numbers<[1], [0], [0], [1], [0, 0, 1, 1], [], []>} : vector<64x64xf32>, vector<64x8xf32>, vector<64x8xf32> -> vector<64x8xf32>
    %c8 = arith.constant 8 : index
    %c0_35 = arith.constant 0 : index
    %87 = vector.load %arg7[%c8, %c0_35] : memref<32x32xf32, #tpu.memory_space<vmem>>, vector<8x32xf32>
    %cst_36 = arith.constant dense<0.000000e+00> : vector<64x32xf32>
    %88 = tpu.matmul %86, %87, %cst_36 {dimension_numbers = #tpu.dot_dimension_numbers<[1], [0], [0], [1], [0, 0, 1, 1], [], []>} : vector<64x8xf32>, vector<8x32xf32>, vector<64x32xf32> -> vector<64x32xf32>
    %89 = arith.addf %70, %88 : vector<64x32xf32>
    %90 = vector.extract_strided_slice %50 {offsets = [0, 16], sizes = [64, 8], strides = [1, 1]} : vector<64x96xf32> to vector<64x8xf32>
    %91 = vector.extract_strided_slice %50 {offsets = [0, 48], sizes = [64, 8], strides = [1, 1]} : vector<64x96xf32> to vector<64x8xf32>
    %92 = vector.extract_strided_slice %50 {offsets = [0, 80], sizes = [64, 8], strides = [1, 1]} : vector<64x96xf32> to vector<64x8xf32>
    %cst_37 = arith.constant dense<0.000000e+00> : vector<64x64xf32>
    %93 = tpu.matmul %90, %91, %cst_37 {dimension_numbers = #tpu.dot_dimension_numbers<[1], [1], [0], [0], [0, 0, 1, 0], [], []>} : vector<64x8xf32>, vector<64x8xf32>, vector<64x64xf32> -> vector<64x64xf32>
    %cst_38 = arith.constant 0.353553385 : f32
    %94 = vector.broadcast %cst_38 : f32 to vector<64x64xf32>
    %95 = arith.mulf %93, %94 : vector<64x64xf32>
    %cst_39 = arith.constant dense<0xFF800000> : vector<64xf32>
    %96 = vector.multi_reduction <maximumf>, %95, %cst_39 [1] : vector<64x64xf32> to vector<64xf32>
    %97 = vector.shape_cast %96 : vector<64xf32> to vector<64x1xf32>
    %98 = vector.broadcast %97 : vector<64x1xf32> to vector<64x64xf32>
    %99 = arith.subf %95, %98 : vector<64x64xf32>
    %100 = math.exp %99 : vector<64x64xf32>
    %cst_40 = arith.constant dense<0.000000e+00> : vector<64xf32>
    %101 = vector.multi_reduction <add>, %100, %cst_40 [1] : vector<64x64xf32> to vector<64xf32>
    %102 = vector.shape_cast %101 : vector<64xf32> to vector<64x1xf32>
    %103 = vector.broadcast %102 : vector<64x1xf32> to vector<64x64xf32>
    %104 = arith.divf %100, %103 : vector<64x64xf32>
    %cst_41 = arith.constant dense<0.000000e+00> : vector<64x8xf32>
    %105 = tpu.matmul %104, %92, %cst_41 {dimension_numbers = #tpu.dot_dimension_numbers<[1], [0], [0], [1], [0, 0, 1, 1], [], []>} : vector<64x64xf32>, vector<64x8xf32>, vector<64x8xf32> -> vector<64x8xf32>
    %c16 = arith.constant 16 : index
    %c0_42 = arith.constant 0 : index
    %106 = vector.load %arg7[%c16, %c0_42] : memref<32x32xf32, #tpu.memory_space<vmem>>, vector<8x32xf32>
    %cst_43 = arith.constant dense<0.000000e+00> : vector<64x32xf32>
    %107 = tpu.matmul %105, %106, %cst_43 {dimension_numbers = #tpu.dot_dimension_numbers<[1], [0], [0], [1], [0, 0, 1, 1], [], []>} : vector<64x8xf32>, vector<8x32xf32>, vector<64x32xf32> -> vector<64x32xf32>
    %108 = arith.addf %89, %107 : vector<64x32xf32>
    %109 = vector.extract_strided_slice %50 {offsets = [0, 24], sizes = [64, 8], strides = [1, 1]} : vector<64x96xf32> to vector<64x8xf32>
    %110 = vector.extract_strided_slice %50 {offsets = [0, 56], sizes = [64, 8], strides = [1, 1]} : vector<64x96xf32> to vector<64x8xf32>
    %111 = vector.extract_strided_slice %50 {offsets = [0, 88], sizes = [64, 8], strides = [1, 1]} : vector<64x96xf32> to vector<64x8xf32>
    %cst_44 = arith.constant dense<0.000000e+00> : vector<64x64xf32>
    %112 = tpu.matmul %109, %110, %cst_44 {dimension_numbers = #tpu.dot_dimension_numbers<[1], [1], [0], [0], [0, 0, 1, 0], [], []>} : vector<64x8xf32>, vector<64x8xf32>, vector<64x64xf32> -> vector<64x64xf32>
    %cst_45 = arith.constant 0.353553385 : f32
    %113 = vector.broadcast %cst_45 : f32 to vector<64x64xf32>
    %114 = arith.mulf %112, %113 : vector<64x64xf32>
    %cst_46 = arith.constant dense<0xFF800000> : vector<64xf32>
    %115 = vector.multi_reduction <maximumf>, %114, %cst_46 [1] : vector<64x64xf32> to vector<64xf32>
    %116 = vector.shape_cast %115 : vector<64xf32> to vector<64x1xf32>
    %117 = vector.broadcast %116 : vector<64x1xf32> to vector<64x64xf32>
    %118 = arith.subf %114, %117 : vector<64x64xf32>
    %119 = math.exp %118 : vector<64x64xf32>
    %cst_47 = arith.constant dense<0.000000e+00> : vector<64xf32>
    %120 = vector.multi_reduction <add>, %119, %cst_47 [1] : vector<64x64xf32> to vector<64xf32>
    %121 = vector.shape_cast %120 : vector<64xf32> to vector<64x1xf32>
    %122 = vector.broadcast %121 : vector<64x1xf32> to vector<64x64xf32>
    %123 = arith.divf %119, %122 : vector<64x64xf32>
    %cst_48 = arith.constant dense<0.000000e+00> : vector<64x8xf32>
    %124 = tpu.matmul %123, %111, %cst_48 {dimension_numbers = #tpu.dot_dimension_numbers<[1], [0], [0], [1], [0, 0, 1, 1], [], []>} : vector<64x64xf32>, vector<64x8xf32>, vector<64x8xf32> -> vector<64x8xf32>
    %c24 = arith.constant 24 : index
    %c0_49 = arith.constant 0 : index
    %125 = vector.load %arg7[%c24, %c0_49] : memref<32x32xf32, #tpu.memory_space<vmem>>, vector<8x32xf32>
    %cst_50 = arith.constant dense<0.000000e+00> : vector<64x32xf32>
    %126 = tpu.matmul %124, %125, %cst_50 {dimension_numbers = #tpu.dot_dimension_numbers<[1], [0], [0], [1], [0, 0, 1, 1], [], []>} : vector<64x8xf32>, vector<8x32xf32>, vector<64x32xf32> -> vector<64x32xf32>
    %127 = arith.addf %108, %126 : vector<64x32xf32>
    %c0_51 = arith.constant 0 : index
    %c0_52 = arith.constant 0 : index
    %128 = vector.load %arg8[%c0_51, %c0_52] : memref<1x32xf32, #tpu.memory_space<vmem>>, vector<1x32xf32>
    %129 = vector.broadcast %128 : vector<1x32xf32> to vector<64x32xf32>
    %130 = arith.addf %127, %129 : vector<64x32xf32>
    %c0_53 = arith.constant 0 : index
    %c0_54 = arith.constant 0 : index
    %c0_55 = arith.constant 0 : index
    %131 = vector.load %arg9[%c0_53, %c0_54, %c0_55] : memref<1x64x32xf32, #tpu.memory_space<vmem>>, vector<1x64x32xf32>
    %132 = vector.shape_cast %131 : vector<1x64x32xf32> to vector<64x32xf32>
    %133 = vector.shape_cast %130 : vector<64x32xf32> to vector<1x64x32xf32>
    tpu.vector_store %arg9[%c0_53, %c0_54, %c0_55], %133 {strides = array<i32>} : memref<1x64x32xf32, #tpu.memory_space<vmem>>, vector<1x64x32xf32>,
    return
  }
  func.func @transform_0(%arg0: i32) -> (i32, i32, i32) {
    %c0_i32 = arith.constant 0 : i32
    %c0_i32_0 = arith.constant 0 : i32
    %c0_i32_1 = arith.constant 0 : i32
    return %arg0, %c0_i32, %c0_i32_0 : i32, i32, i32
  }
  func.func @transform_1(%arg0: i32) -> (i32, i32, i32) {
    %c0_i32 = arith.constant 0 : i32
    %c0_i32_0 = arith.constant 0 : i32
    %c0_i32_1 = arith.constant 0 : i32
    return %arg0, %c0_i32, %c0_i32_0 : i32, i32, i32
  }
  func.func @transform_2(%arg0: i32) -> (i32, i32) {
    %c0_i32 = arith.constant 0 : i32
    %c0_i32_0 = arith.constant 0 : i32
    %c0_i32_1 = arith.constant 0 : i32
    return %c0_i32, %c0_i32_0 : i32, i32
  }
  func.func @transform_3(%arg0: i32) -> (i32, i32) {
    %c0_i32 = arith.constant 0 : i32
    %c0_i32_0 = arith.constant 0 : i32
    %c0_i32_1 = arith.constant 0 : i32
    return %c0_i32, %c0_i32_0 : i32, i32
  }
  func.func @transform_4(%arg0: i32) -> (i32, i32) {
    %c0_i32 = arith.constant 0 : i32
    %c0_i32_0 = arith.constant 0 : i32
    %c0_i32_1 = arith.constant 0 : i32
    return %c0_i32, %c0_i32_0 : i32, i32
  }
  func.func @transform_5(%arg0: i32) -> (i32, i32) {
    %c0_i32 = arith.constant 0 : i32
    %c0_i32_0 = arith.constant 0 : i32
    %c0_i32_1 = arith.constant 0 : i32
    return %c0_i32, %c0_i32_0 : i32, i32
  }
  func.func @transform_6(%arg0: i32) -> (i32, i32) {
    %c0_i32 = arith.constant 0 : i32
    %c0_i32_0 = arith.constant 0 : i32
    %c0_i32_1 = arith.constant 0 : i32
    return %c0_i32, %c0_i32_0 : i32, i32
  }
  func.func @transform_7(%arg0: i32) -> (i32, i32) {
    %c0_i32 = arith.constant 0 : i32
    %c0_i32_0 = arith.constant 0 : i32
    %c0_i32_1 = arith.constant 0 : i32
    return %c0_i32, %c0_i32_0 : i32, i32
  }
  func.func @transform_8(%arg0: i32) -> (i32, i32, i32) {
    %c0_i32 = arith.constant 0 : i32
    %c0_i32_0 = arith.constant 0 : i32
    %c0_i32_1 = arith.constant 0 : i32
    return %arg0, %c0_i32, %c0_i32_0 : i32, i32, i32
  }
}

</mosaic_0001>

<llo_original>
// kernel: tpu_custom_call.1
$region0: #{tpu_custom_call.1}
  #allocation0 [shape = 'u32[]', space=smem, size = 0x4, offset = 0x4, fixed_abs, tag = 'smem constant byte address 0x4 - core index']
  #allocation1 [shape = 'u32[144,128]{1,0:T(1,128)}', space=vmem, size = 0x12000, scoped, tag = 'internal scratch']
  %s0 = inlined_call_operand.vmem [shape: f32[2,64,32], index: 0, kind: input, shape index: {}]
  %s1 = inlined_call_operand.vmem [shape: f32[2,64,32], index: 1, kind: input, shape index: {}]
  %s2 = inlined_call_operand.vmem [shape: f32[1,32], index: 2, kind: input, shape index: {}]
  %s3 = inlined_call_operand.vmem [shape: f32[1,32], index: 3, kind: input, shape index: {}]
  %s4 = inlined_call_operand.vmem [shape: f32[32,96], index: 4, kind: input, shape index: {}]
  %s5 = inlined_call_operand.vmem [shape: f32[1,96], index: 5, kind: input, shape index: {}]
  %s6 = inlined_call_operand.vmem [shape: f32[32,32], index: 6, kind: input, shape index: {}]
  %s7 = inlined_call_operand.vmem [shape: f32[1,32], index: 7, kind: input, shape index: {}]
  %s8 = inlined_call_operand.vmem [shape: f32[2,64,32], index: 8, kind: output, shape index: {}]
  %s9 = sld [smem:[#allocation0]]
  $region65: #{tpu_custom_call.1} parent=0
    _
  %s11 = ssub.s32 1, %s9
  %s12 = scalar_select 0, %s11, %s9
  loop: start=0, step=1, limit=4
  $region2: #{tpu_custom_call.1} parent=0 // loop_pre_header
    _
  $region3: #{tpu_custom_call.1} parent=0 // loop_header
    %s14 = sphi 0, %s18
    %p15 = scmp.ge.s32.totalorder %s14, 4
    %s24 = sphi 0, %s26
    %s27 = sphi 0, %s24
    %s28 = sphi 0, %s27
    %s44 = sphi 0, %s28
    %s50 = sphi 0, %s52
    %s53 = sphi 0, %s50
    %s54 = sphi 0, %s53
    %s70 = sphi 0, %s54
    %s74 = sphi 0, %s74
    %s76 = sphi 0, %s74
    %s77 = sphi 0, %s76
    %s91 = sphi 0, %s77
    %s95 = sphi 0, %s95
    %s97 = sphi 0, %s95
    %s98 = sphi 0, %s97
    %s112 = sphi 0, %s98
    %s116 = sphi 0, %s116
    %s118 = sphi 0, %s116
    %s119 = sphi 0, %s118
    %s133 = sphi 0, %s119
    %s137 = sphi 0, %s137
    %s139 = sphi 0, %s137
    %s140 = sphi 0, %s139
    %s154 = sphi 0, %s140
    %s158 = sphi 0, %s158
    %s160 = sphi 0, %s158
    %s161 = sphi 0, %s160
    %s175 = sphi 0, %s161
    %s179 = sphi 0, %s179
    %s181 = sphi 0, %s179
    %s182 = sphi 0, %s181
    %s196 = sphi 0, %s182
    %s202 = sphi 0, %s204
    %s205 = sphi 0, %s202
    %s206 = sphi 0, %s205
    %s222 = sphi 0, %s206
  $region4: #{tpu_custom_call.1} parent=0 // loop_header_branch
    %17 = sbr.rel (%p15) target = $region8
  $region5: #{tpu_custom_call.1} parent=0 // loop_body
    %s19 = ssub.s32 %s14, 1
    %s20 = ssub.s32 %s14, 2
    %s21 = sadd.s32 %s14, 1
    %s22 = ssub.s32 %s14, %s21
    %p23 = scmp.eq.s32.totalorder %s22, 0
    %s25 = sadd.s32 %s24, 1
    %s26 = scalar_select %p23, %s24, %s25
    %p29 = pneg %p23
    %p30 = scmp.eq.s32.totalorder %s14, 1
    %p31 = por %p29, %p30
    %p32 = scmp.ne.s32.totalorder %s24, %s27
    %p33 = scmp.eq.s32.totalorder %s14, 0
    %p34 = por %p32, %p33
    %p35 = scmp.ne.s32.totalorder %s24, %s27
    %p36 = scmp.eq.s32.totalorder %s19, 1
    %p37 = por %p35, %p36
    %p38 = scmp.ne.s32.totalorder %s27, %s28
    %p39 = scmp.eq.s32.totalorder %s19, 0
    %p40 = por %p38, %p39
    %p41 = scmp.ne.s32.totalorder %s27, %s28
    %p42 = scmp.eq.s32.totalorder %s20, 1
    %p43 = por %p41, %p42
    %p45 = scmp.ne.s32.totalorder %s28, %s44
    %p46 = scmp.eq.s32.totalorder %s20, 0
    %p47 = por %p45, %p46
    %s48 = ssub.s32 %s14, %s21
    %p49 = scmp.eq.s32.totalorder %s48, 0
    %s51 = sadd.s32 %s50, 1
    %s52 = scalar_select %p49, %s50, %s51
    %p55 = pneg %p49
    %p56 = scmp.eq.s32.totalorder %s14, 1
    %p57 = por %p55, %p56
    %p58 = scmp.ne.s32.totalorder %s50, %s53
    %p59 = scmp.eq.s32.totalorder %s14, 0
    %p60 = por %p58, %p59
    %p61 = scmp.ne.s32.totalorder %s50, %s53
    %p62 = scmp.eq.s32.totalorder %s19, 1
    %p63 = por %p61, %p62
    %p64 = scmp.ne.s32.totalorder %s53, %s54
    %p65 = scmp.eq.s32.totalorder %s19, 0
    %p66 = por %p64, %p65
    %p67 = scmp.ne.s32.totalorder %s53, %s54
    %p68 = scmp.eq.s32.totalorder %s20, 1
    %p69 = por %p67, %p68
    %p71 = scmp.ne.s32.totalorder %s54, %s70
    %p72 = scmp.eq.s32.totalorder %s20, 0
    %p73 = por %p71, %p72
    %s75 = sadd.s32 %s74, 1
    %p78 = scmp.eq.s32.totalorder %s14, 1
    %p79 = scmp.ne.s32.totalorder %s74, %s76
    %p80 = scmp.eq.s32.totalorder %s14, 0
    %p81 = por %p79, %p80
    %p82 = scmp.ne.s32.totalorder %s74, %s76
    %p83 = scmp.eq.s32.totalorder %s19, 1
    %p84 = por %p82, %p83
    %p85 = scmp.ne.s32.totalorder %s76, %s77
    %p86 = scmp.eq.s32.totalorder %s19, 0
    %p87 = por %p85, %p86
    %p88 = scmp.ne.s32.totalorder %s76, %s77
    %p89 = scmp.eq.s32.totalorder %s20, 1
    %p90 = por %p88, %p89
    %p92 = scmp.ne.s32.totalorder %s77, %s91
    %p93 = scmp.eq.s32.totalorder %s20, 0
    %p94 = por %p92, %p93
    %s96 = sadd.s32 %s95, 1
    %p99 = scmp.eq.s32.totalorder %s14, 1
    %p100 = scmp.ne.s32.totalorder %s95, %s97
    %p101 = scmp.eq.s32.totalorder %s14, 0
    %p102 = por %p100, %p101
    %p103 = scmp.ne.s32.totalorder %s95, %s97
    %p104 = scmp.eq.s32.totalorder %s19, 1
    %p105 = por %p103, %p104
    %p106 = scmp.ne.s32.totalorder %s97, %s98
    %p107 = scmp.eq.s32.totalorder %s19, 0
    %p108 = por %p106, %p107
    %p109 = scmp.ne.s32.totalorder %s97, %s98
    %p110 = scmp.eq.s32.totalorder %s20, 1
    %p111 = por %p109, %p110
    %p113 = scmp.ne.s32.totalorder %s98, %s112
    %p114 = scmp.eq.s32.totalorder %s20, 0
    %p115 = por %p113, %p114
    %s117 = sadd.s32 %s116, 1
    %p120 = scmp.eq.s32.totalorder %s14, 1
    %p121 = scmp.ne.s32.totalorder %s116, %s118
    %p122 = scmp.eq.s32.totalorder %s14, 0
    %p123 = por %p121, %p122
    %p124 = scmp.ne.s32.totalorder %s116, %s118
    %p125 = scmp.eq.s32.totalorder %s19, 1
    %p126 = por %p124, %p125
    %p127 = scmp.ne.s32.totalorder %s118, %s119
    %p128 = scmp.eq.s32.totalorder %s19, 0
    %p129 = por %p127, %p128
    %p130 = scmp.ne.s32.totalorder %s118, %s119
    %p131 = scmp.eq.s32.totalorder %s20, 1
    %p132 = por %p130, %p131
    %p134 = scmp.ne.s32.totalorder %s119, %s133
    %p135 = scmp.eq.s32.totalorder %s20, 0
    %p136 = por %p134, %p135
    %s138 = sadd.s32 %s137, 1
    %p141 = scmp.eq.s32.totalorder %s14, 1
    %p142 = scmp.ne.s32.totalorder %s137, %s139
    %p143 = scmp.eq.s32.totalorder %s14, 0
    %p144 = por %p142, %p143
    %p145 = scmp.ne.s32.totalorder %s137, %s139
    %p146 = scmp.eq.s32.totalorder %s19, 1
    %p147 = por %p145, %p146
    %p148 = scmp.ne.s32.totalorder %s139, %s140
    %p149 = scmp.eq.s32.totalorder %s19, 0
    %p150 = por %p148, %p149
    %p151 = scmp.ne.s32.totalorder %s139, %s140
    %p152 = scmp.eq.s32.totalorder %s20, 1
    %p153 = por %p151, %p152
    %p155 = scmp.ne.s32.totalorder %s140, %s154
    %p156 = scmp.eq.s32.totalorder %s20, 0
    %p157 = por %p155, %p156
    %s159 = sadd.s32 %s158, 1
    %p162 = scmp.eq.s32.totalorder %s14, 1
    %p163 = scmp.ne.s32.totalorder %s158, %s160
    %p164 = scmp.eq.s32.totalorder %s14, 0
    %p165 = por %p163, %p164
    %p166 = scmp.ne.s32.totalorder %s158, %s160
    %p167 = scmp.eq.s32.totalorder %s19, 1
    %p168 = por %p166, %p167
    %p169 = scmp.ne.s32.totalorder %s160, %s161
    %p170 = scmp.eq.s32.totalorder %s19, 0
    %p171 = por %p169, %p170
    %p172 = scmp.ne.s32.totalorder %s160, %s161
    %p173 = scmp.eq.s32.totalorder %s20, 1
    %p174 = por %p172, %p173
    %p176 = scmp.ne.s32.totalorder %s161, %s175
    %p177 = scmp.eq.s32.totalorder %s20, 0
    %p178 = por %p176, %p177
    %s180 = sadd.s32 %s179, 1
    %p183 = scmp.eq.s32.totalorder %s14, 1
    %p184 = scmp.ne.s32.totalorder %s179, %s181
    %p185 = scmp.eq.s32.totalorder %s14, 0
    %p186 = por %p184, %p185
    %p187 = scmp.ne.s32.totalorder %s179, %s181
    %p188 = scmp.eq.s32.totalorder %s19, 1
    %p189 = por %p187, %p188
    %p190 = scmp.ne.s32.totalorder %s181, %s182
    %p191 = scmp.eq.s32.totalorder %s19, 0
    %p192 = por %p190, %p191
    %p193 = scmp.ne.s32.totalorder %s181, %s182
    %p194 = scmp.eq.s32.totalorder %s20, 1
    %p195 = por %p193, %p194
    %p197 = scmp.ne.s32.totalorder %s182, %s196
    %p198 = scmp.eq.s32.totalorder %s20, 0
    %p199 = por %p197, %p198
    %s200 = ssub.s32 %s14, %s21
    %p201 = scmp.eq.s32.totalorder %s200, 0
    %s203 = sadd.s32 %s202, 1
    %s204 = scalar_select %p201, %s202, %s203
    %p207 = pneg %p201
    %p208 = scmp.eq.s32.totalorder %s14, 1
    %p209 = por %p207, %p208
    %p210 = scmp.ne.s32.totalorder %s202, %s205
    %p211 = scmp.eq.s32.totalorder %s14, 0
    %p212 = por %p210, %p211
    %p213 = scmp.ne.s32.totalorder %s202, %s205
    %p214 = scmp.eq.s32.totalorder %s19, 1
    %p215 = por %p213, %p214
    %p216 = scmp.ne.s32.totalorder %s205, %s206
    %p217 = scmp.eq.s32.totalorder %s19, 0
    %p218 = por %p216, %p217
    %p219 = scmp.ne.s32.totalorder %s205, %s206
    %p220 = scmp.eq.s32.totalorder %s20, 1
    %p221 = por %p219, %p220
    %p223 = scmp.ne.s32.totalorder %s206, %s222
    %p224 = scmp.eq.s32.totalorder %s20, 0
    %p225 = por %p223, %p224
    %p226 = scmp.le.s32.totalorder 1, %s14
    %p227 = scmp.lt.s32.totalorder %s14, 3
    %p228 = pnand %p226, %p227
    %p229 = pneg %p228
    // Predicated region
    $region9: #{tpu_custom_call.1} parent=5 // pred_check
      _
    $region10: #{tpu_custom_call.1} parent=5 // pred_check_branch
      %231 = sbr.rel (%p228) target = $region12
    $region11: #{tpu_custom_call.1} parent=5 // pred_region
      %s232 = ssub.s32 %s14, 1
      // Predicated region
      $region13: #{tpu_custom_call.1} parent=11 // pred_check
        %p233 = pneg %p87
      $region14: #{tpu_custom_call.1} parent=11 // pred_check_branch
        %235 = sbr.rel (%p233) target = $region16
      $region15: #{tpu_custom_call.1} parent=11 // pred_region
        _
      $region16: #{tpu_custom_call.1} parent=11 // pred_fallthru
        _
      // Predicated region
      $region17: #{tpu_custom_call.1} parent=11 // pred_check
        %p236 = pneg %p108
      $region18: #{tpu_custom_call.1} parent=11 // pred_check_branch
        %238 = sbr.rel (%p236) target = $region20
      $region19: #{tpu_custom_call.1} parent=11 // pred_region
        _
      $region20: #{tpu_custom_call.1} parent=11 // pred_fallthru
        _
      // Predicated region
      $region21: #{tpu_custom_call.1} parent=11 // pred_check
        %p239 = pneg %p129
      $region22: #{tpu_custom_call.1} parent=11 // pred_check_branch
        %241 = sbr.rel (%p239) target = $region24
      $region23: #{tpu_custom_call.1} parent=11 // pred_region
        _
      $region24: #{tpu_custom_call.1} parent=11 // pred_fallthru
        _
      // Predicated region
      $region25: #{tpu_custom_call.1} parent=11 // pred_check
        %p242 = pneg %p150
      $region26: #{tpu_custom_call.1} parent=11 // pred_check_branch
        %244 = sbr.rel (%p242) target = $region28
      $region27: #{tpu_custom_call.1} parent=11 // pred_region
        _
      $region28: #{tpu_custom_call.1} parent=11 // pred_fallthru
        _
      // Predicated region
      $region29: #{tpu_custom_call.1} parent=11 // pred_check
        %p245 = pneg %p171
      $region30: #{tpu_custom_call.1} parent=11 // pred_check_branch
        %247 = sbr.rel (%p245) target = $region32
      $region31: #{tpu_custom_call.1} parent=11 // pred_region
        _
      $region32: #{tpu_custom_call.1} parent=11 // pred_fallthru
        _
      // Predicated region
      $region33: #{tpu_custom_call.1} parent=11 // pred_check
        %p248 = pneg %p192
      $region34: #{tpu_custom_call.1} parent=11 // pred_check_branch
        %250 = sbr.rel (%p248) target = $region36
      $region35: #{tpu_custom_call.1} parent=11 // pred_region
        _
      $region36: #{tpu_custom_call.1} parent=11 // pred_fallthru
        _
    $region12: #{tpu_custom_call.1} parent=5 // pred_fallthru
      _
    %p251 = scmp.lt.s32.totalorder %s14, 2
    // Predicated region
    $region37: #{tpu_custom_call.1} parent=5 // pred_check
      %p252 = pneg %p251
    $region38: #{tpu_custom_call.1} parent=5 // pred_check_branch
      %254 = sbr.rel (%p252) target = $region40
    $region39: #{tpu_custom_call.1} parent=5 // pred_region
      // Predicated region
      $region41: #{tpu_custom_call.1} parent=39 // pred_check
        %p255 = pneg %p34
      $region42: #{tpu_custom_call.1} parent=39 // pred_check_branch
        %257 = sbr.rel (%p255) target = $region44
      $region43: #{tpu_custom_call.1} parent=39 // pred_region
        %p258 = scmp.lt.s32.totalorder %s14, 1
        %s259 = scalar_select %p258, %s14, 1
        %s260 = smul.addr %s259, 8
        %s261 = smul.addr %s260, 8
        %s262 = scalar_lea.vmem %s0, %s261
      $region44: #{tpu_custom_call.1} parent=39 // pred_fallthru
        _
      // Predicated region
      $region45: #{tpu_custom_call.1} parent=39 // pred_check
        %p263 = pneg %p60
      $region46: #{tpu_custom_call.1} parent=39 // pred_check_branch
        %265 = sbr.rel (%p263) target = $region48
      $region47: #{tpu_custom_call.1} parent=39 // pred_region
        %p266 = scmp.lt.s32.totalorder %s14, 1
        %s267 = scalar_select %p266, %s14, 1
        %s268 = smul.addr %s267, 8
        %s269 = smul.addr %s268, 8
        %s270 = scalar_lea.vmem %s1, %s269
      $region48: #{tpu_custom_call.1} parent=39 // pred_fallthru
        _
    $region40: #{tpu_custom_call.1} parent=5 // pred_fallthru
      _
    %p271 = scmp.le.s32.totalorder 1, %s14
    %p272 = scmp.lt.s32.totalorder %s14, 3
    %p273 = pnand %p271, %p272
    %p274 = pneg %p273
    // Predicated region
    $region49: #{tpu_custom_call.1} parent=5 // pred_check
      _
    $region50: #{tpu_custom_call.1} parent=5 // pred_check_branch
      %276 = sbr.rel (%p273) target = $region52
    $region51: #{tpu_custom_call.1} parent=5 // pred_region
      %s277 = ssub.s32 %s14, 1
      %p278 = scmp.lt.s32.totalorder %s19, 1
      %s279 = scalar_select %p278, %s19, 1
      %s280 = smul.addr %s279, 8
      %s281 = smul.addr %s280, 8
      %s282 = scalar_lea.vmem %s0, %s281
      %p283 = pneg %p40
      %p284 = pneg %p37
      %p285 = scmp.lt.s32.totalorder %s19, 1
      %s286 = scalar_select %p285, %s19, 1
      %s287 = smul.addr %s286, 8
      %s288 = smul.addr %s287, 8
      %s289 = scalar_lea.vmem %s1, %s288
      %p290 = pneg %p66
      %p291 = pneg %p63
      %p292 = pneg %p87
      %p293 = pneg %p84
      %p294 = pneg %p108
      %p295 = pneg %p105
      %p296 = pneg %p129
      %p297 = pneg %p126
      %p298 = pneg %p150
      %p299 = pneg %p147
      %p300 = pneg %p171
      %p301 = pneg %p168
      %p302 = pneg %p192
      %p303 = pneg %p189
      %p304 = pneg %p218
      %p305 = pneg %p215
      %p306 = scmp.lt.s32.totalorder %s19, 1
      %s307 = scalar_select %p306, %s19, 1
      %s308 = smul.addr %s307, 8
      %s309 = smul.addr %s308, 8
      %s310 = scalar_lea.vmem %s8, %s309
      %p311 = scmp.lt.s32.totalorder %s19, 1
      %s312 = scalar_select %p311, %s19, 1
      %s313 = smul.addr %s312, 8
      %s314 = smul.addr %s313, 8
      %s315 = scalar_lea.vmem %s0, %s314
      %p316 = scmp.lt.s32.totalorder %s19, 1
      %s317 = scalar_select %p316, %s19, 1
      %s318 = smul.addr %s317, 8
      %s319 = smul.addr %s318, 8
      %s320 = scalar_lea.vmem %s1, %s319
      %p321 = scmp.lt.s32.totalorder %s19, 1
      %s322 = scalar_select %p321, %s19, 1
      %s323 = smul.addr %s322, 8
      %s324 = smul.addr %s323, 8
      %s325 = scalar_lea.vmem %s8, %s324
      %v326 = vld [vmem:[%s315] sm:$0xff]
      %v327 = vld [vmem:[%s315 + $0x8] sm:$0xff]
      %v328 = vld [vmem:[%s315 + $0x10] sm:$0xff]
      %v329 = vld [vmem:[%s315 + $0x18] sm:$0xff]
      %v330 = vld [vmem:[%s315 + $0x20] sm:$0xff]
      %v331 = vld [vmem:[%s315 + $0x28] sm:$0xff]
      %v332 = vld [vmem:[%s315 + $0x30] sm:$0xff]
      %v333 = vld [vmem:[%s315 + $0x38] sm:$0xff]
      %v334 = vld [vmem:[%s320] sm:$0xff]
      %v335 = vld [vmem:[%s320 + $0x8] sm:$0xff]
      %v336 = vld [vmem:[%s320 + $0x10] sm:$0xff]
      %v337 = vld [vmem:[%s320 + $0x18] sm:$0xff]
      %v338 = vld [vmem:[%s320 + $0x20] sm:$0xff]
      %v339 = vld [vmem:[%s320 + $0x28] sm:$0xff]
      %v340 = vld [vmem:[%s320 + $0x30] sm:$0xff]
      %v341 = vld [vmem:[%s320 + $0x38] sm:$0xff]
      %vm342 = vcmask 261120
      %v343 = vsel %vm342, %v334, 0.0
      %344 = vadd.xlane.f32.xlu0 %v343
      %v345 = vpop.xlane.xlu0 %344
      %v346 = vsel %vm342, %v335, 0.0
      %347 = vadd.xlane.f32.xlu0 %v346
      %v348 = vpop.xlane.xlu0 %347
      %v349 = vsel %vm342, %v336, 0.0
      %350 = vadd.xlane.f32.xlu0 %v349
      %v351 = vpop.xlane.xlu0 %350
      %v352 = vsel %vm342, %v337, 0.0
      %353 = vadd.xlane.f32.xlu0 %v352
      %v354 = vpop.xlane.xlu0 %353
      %v355 = vsel %vm342, %v338, 0.0
      %356 = vadd.xlane.f32.xlu0 %v355
      %v357 = vpop.xlane.xlu0 %356
      %v358 = vsel %vm342, %v339, 0.0
      %359 = vadd.xlane.f32.xlu0 %v358
      %v360 = vpop.xlane.xlu0 %359
      %v361 = vsel %vm342, %v340, 0.0
      %362 = vadd.xlane.f32.xlu0 %v361
      %v363 = vpop.xlane.xlu0 %362
      %v364 = vsel %vm342, %v341, 0.0
      %365 = vadd.xlane.f32.xlu0 %v364
      %v366 = vpop.xlane.xlu0 %365
      %v367 = vrcp.pop 32.0
      %v368 = vmul.f32 %v345, %v367
      %v369 = vmul.f32 %v348, %v367
      %v370 = vmul.f32 %v351, %v367
      %v371 = vmul.f32 %v354, %v367
      %v372 = vmul.f32 %v357, %v367
      %v373 = vmul.f32 %v360, %v367
      %v374 = vmul.f32 %v363, %v367
      %v375 = vmul.f32 %v366, %v367
      %v376 = vsub.f32 %v334, %v368
      %v377 = vsub.f32 %v335, %v369
      %v378 = vsub.f32 %v336, %v370
      %v379 = vsub.f32 %v337, %v371
      %v380 = vsub.f32 %v338, %v372
      %v381 = vsub.f32 %v339, %v373
      %v382 = vsub.f32 %v340, %v374
      %v383 = vsub.f32 %v341, %v375
      %v384 = vmul.f32 %v376, %v376
      %v385 = vmul.f32 %v377, %v377
      %v386 = vmul.f32 %v378, %v378
      %v387 = vmul.f32 %v379, %v379
      %v388 = vmul.f32 %v380, %v380
      %v389 = vmul.f32 %v381, %v381
      %v390 = vmul.f32 %v382, %v382
      %v391 = vmul.f32 %v383, %v383
      %v392 = vsel %vm342, %v384, 0.0
      %393 = vadd.xlane.f32.xlu0 %v392
      %v394 = vpop.xlane.xlu0 %393
      %v395 = vsel %vm342, %v385, 0.0
      %396 = vadd.xlane.f32.xlu0 %v395
      %v397 = vpop.xlane.xlu0 %396
      %v398 = vsel %vm342, %v386, 0.0
      %399 = vadd.xlane.f32.xlu0 %v398
      %v400 = vpop.xlane.xlu0 %399
      %v401 = vsel %vm342, %v387, 0.0
      %402 = vadd.xlane.f32.xlu0 %v401
      %v403 = vpop.xlane.xlu0 %402
      %v404 = vsel %vm342, %v388, 0.0
      %405 = vadd.xlane.f32.xlu0 %v404
      %v406 = vpop.xlane.xlu0 %405
      %v407 = vsel %vm342, %v389, 0.0
      %408 = vadd.xlane.f32.xlu0 %v407
      %v409 = vpop.xlane.xlu0 %408
      %v410 = vsel %vm342, %v390, 0.0
      %411 = vadd.xlane.f32.xlu0 %v410
      %v412 = vpop.xlane.xlu0 %411
      %v413 = vsel %vm342, %v391, 0.0
      %414 = vadd.xlane.f32.xlu0 %v413
      %v415 = vpop.xlane.xlu0 %414
      %v416 = vmul.f32 %v394, %v367
      %v417 = vmul.f32 %v397, %v367
      %v418 = vmul.f32 %v400, %v367
      %v419 = vmul.f32 %v403, %v367
      %v420 = vmul.f32 %v406, %v367
      %v421 = vmul.f32 %v409, %v367
      %v422 = vmul.f32 %v412, %v367
      %v423 = vmul.f32 %v415, %v367
      %v424 = vadd.f32 %v416, 1e-05
      %v425 = vadd.f32 %v417, 1e-05
      %v426 = vadd.f32 %v418, 1e-05
      %v427 = vadd.f32 %v419, 1e-05
      %v428 = vadd.f32 %v420, 1e-05
      %v429 = vadd.f32 %v421, 1e-05
      %v430 = vadd.f32 %v422, 1e-05
      %v431 = vadd.f32 %v423, 1e-05
      %v432 = vrsqrt.pop %v424
      %v433 = vrsqrt.pop %v425
      %v434 = vrsqrt.pop %v426
      %v435 = vrsqrt.pop %v427
      %v436 = vrsqrt.pop %v428
      %v437 = vrsqrt.pop %v429
      %v438 = vrsqrt.pop %v430
      %v439 = vrsqrt.pop %v431
      %v440 = vmul.f32 %v376, %v432
      %v441 = vmul.f32 %v377, %v433
      %v442 = vmul.f32 %v378, %v434
      %v443 = vmul.f32 %v379, %v435
      %v444 = vmul.f32 %v380, %v436
      %v445 = vmul.f32 %v381, %v437
      %v446 = vmul.f32 %v382, %v438
      %v447 = vmul.f32 %v383, %v439
      %v448 = vld [vmem:[%s2] sm:$0x1]
      %v450 = vlaneseq
      %v451 = vshrl.u32 %v450, 7
      %v452 = vsub.s32 0, %v451
      %v453 = vrot.slane %v448, %v452
      %v455 = vmul.f32 %v440, %v453
      %v456 = vmul.f32 %v441, %v453
      %v457 = vmul.f32 %v442, %v453
      %v458 = vmul.f32 %v443, %v453
      %v459 = vmul.f32 %v444, %v453
      %v460 = vmul.f32 %v445, %v453
      %v461 = vmul.f32 %v446, %v453
      %v462 = vmul.f32 %v447, %v453
      %v463 = vld [vmem:[%s3] sm:$0x1]
      %v465 = vlaneseq
      %v466 = vshrl.u32 %v465, 7
      %v467 = vsub.s32 0, %v466
      %v468 = vrot.slane %v463, %v467
      %v470 = vadd.f32 %v455, %v468
      %v471 = vadd.f32 %v456, %v468
      %v472 = vadd.f32 %v457, %v468
      %v473 = vadd.f32 %v458, %v468
      %v474 = vadd.f32 %v459, %v468
      %v475 = vadd.f32 %v460, %v468
      %v476 = vadd.f32 %v461, %v468
      %v477 = vadd.f32 %v462, %v468
      %v478 = vld [vmem:[%s4] sm:$0xff]
      %v479 = vld [vmem:[%s4 + $0x8] sm:$0xff]
      %v480 = vld [vmem:[%s4 + $0x10] sm:$0xff]
      %v481 = vld [vmem:[%s4 + $0x18] sm:$0xff]
      %v482 = vld [vmem:[%s5] sm:$0x1]
      %v484 = vlaneseq
      %v485 = vshrl.u32 %v484, 7
      %v486 = vsub.s32 0, %v485
      %v487 = vrot.slane %v482, %v486
      %v490 = vsel %vm342, %v326, 0
      %v493 = vsel %vm342, %v327, 0
      %v496 = vsel %vm342, %v328, 0
      %v499 = vsel %vm342, %v329, 0
      %v502 = vsel %vm342, %v330, 0
      %v505 = vsel %vm342, %v331, 0
      %v508 = vsel %vm342, %v332, 0
      %v511 = vsel %vm342, %v333, 0
      %v514 = vsel %vm342, %v470, 0
      %v517 = vsel %vm342, %v471, 0
      %v520 = vsel %vm342, %v472, 0
      %v523 = vsel %vm342, %v473, 0
      %v526 = vsel %vm342, %v474, 0
      %v529 = vsel %vm342, %v475, 0
      %v532 = vsel %vm342, %v476, 0
      %v535 = vsel %vm342, %v477, 0
      %537 = vmatprep.subr.mxu0 0.0
      %538 = vmatpush1.msra.mxu0 %v478
      %539 = vmatprep.subr.mxu0 0.0
      %540 = vmatpush1.msra.mxu0 %v479
      %541 = vmatprep.subr.mxu0 0.0
      %542 = vmatpush1.msra.mxu0 %v480
      %543 = vmatprep.subr.mxu0 0.0
      %544 = vmatpush1.msra.mxu0 %v481
      %545 = vmatprep.subr.mxu0 0.0
      %546 = vmatpush1.msra.mxu0 0.0
      %547 = vmatprep.subr.mxu0 0.0
      %548 = vmatpush1.msra.mxu0 0.0
      %549 = vmatprep.subr.mxu0 0.0
      %550 = vmatpush1.msra.mxu0 0.0
      %551 = vmatprep.subr.mxu0 0.0
      %552 = vmatpush1.msra.mxu0 0.0
      %553 = vmatprep.subr.mxu0 0.0
      %554 = vmatpush1.msra.mxu0 0.0
      %555 = vmatprep.subr.mxu0 0.0
      %556 = vmatpush1.msra.mxu0 0.0
      %557 = vmatprep.subr.mxu0 0.0
      %558 = vmatpush1.msra.mxu0 0.0
      %559 = vmatprep.subr.mxu0 0.0
      %560 = vmatpush1.msra.mxu0 0.0
      %561 = vmatprep.subr.mxu0 0.0
      %562 = vmatpush1.msra.mxu0 0.0
      %563 = vmatprep.subr.mxu0 0.0
      %564 = vmatpush1.msra.mxu0 0.0
      %565 = vmatprep.subr.mxu0 0.0
      %566 = vmatpush1.msra.mxu0 0.0
      %567 = vmatprep.subr.mxu0 0.0
      %568 = vmatpush1.msra.mxu0 0.0
      %569 = vmatprep.subr.mxu0 0.0
      %570 = vmatpush1.msra.mxu0 0.0
      %571 = vmatprep.subr.mxu0 0.0
      %572 = vmatpush1.msra.mxu0 0.0
      %573 = vmatprep.subr.mxu0 0.0
      %574 = vmatpush1.msra.mxu0 0.0
      %575 = vmatprep.subr.mxu0 0.0
      %576 = vmatpush1.msra.mxu0 0.0
      %577 = vmatprep.subr.mxu0 0.0
      %578 = vmatpush1.msra.mxu0 0.0
      %579 = vmatprep.subr.mxu0 0.0
      %580 = vmatpush1.msra.mxu0 0.0
      %581 = vmatprep.subr.mxu0 0.0
      %582 = vmatpush1.msra.mxu0 0.0
      %583 = vmatprep.subr.mxu0 0.0
      %584 = vmatpush1.msra.mxu0 0.0
      %585 = vmatprep.subr.mxu0 0.0
      %586 = vmatpush1.msra.mxu0 0.0
      %587 = vmatprep.subr.mxu0 0.0
      %588 = vmatpush1.msra.mxu0 0.0
      %589 = vmatprep.subr.mxu0 0.0
      %590 = vmatpush1.msra.mxu0 0.0
      %591 = vmatprep.subr.mxu0 0.0
      %592 = vmatpush1.msra.mxu0 0.0
      %593 = vmatprep.subr.mxu0 0.0
      %594 = vmatpush1.msra.mxu0 0.0
      %595 = vmatprep.subr.mxu0 0.0
      %596 = vmatpush1.msra.mxu0 0.0
      %597 = vmatprep.subr.mxu0 0.0
      %598 = vmatpush1.msra.mxu0 0.0
      %599 = vmatprep.subr.mxu0 0.0
      %600 = vmatpush1.msra.mxu0 0.0
      %601 = vmatprep.mubr.f32.mxu0 0.0
      %602 = vmatmul.mubr.f32.gmra.mrb[0].mxu0 %v490
      %v603 = vpop.f32.mrb[0].mxu0
      %v604 = vadd.f32 %v487, %v603
      %v605 = vpop.f32.mrb[0].mxu0
      %606 = vmatprep.mubr.f32.mxu0 0.0
      %607 = vmatmul.mubr.f32.gmra.mrb[0].mxu0 %v493
      %v608 = vpop.f32.mrb[0].mxu0
      %v609 = vadd.f32 %v487, %v608
      %v610 = vpop.f32.mrb[0].mxu0
      %611 = vmatprep.mubr.f32.mxu0 0.0
      %612 = vmatmul.mubr.f32.gmra.mrb[0].mxu0 %v496
      %v613 = vpop.f32.mrb[0].mxu0
      %v614 = vadd.f32 %v487, %v613
      %v615 = vpop.f32.mrb[0].mxu0
      %616 = vmatprep.mubr.f32.mxu0 0.0
      %617 = vmatmul.mubr.f32.gmra.mrb[0].mxu0 %v499
      %v618 = vpop.f32.mrb[0].mxu0
      %v619 = vadd.f32 %v487, %v618
      %v620 = vpop.f32.mrb[0].mxu0
      %621 = vmatprep.mubr.f32.mxu0 0.0
      %622 = vmatmul.mubr.f32.gmra.mrb[0].mxu0 %v502
      %v623 = vpop.f32.mrb[0].mxu0
      %v624 = vadd.f32 %v487, %v623
      %v625 = vpop.f32.mrb[0].mxu0
      %626 = vmatprep.mubr.f32.mxu0 0.0
      %627 = vmatmul.mubr.f32.gmra.mrb[0].mxu0 %v505
      %v628 = vpop.f32.mrb[0].mxu0
      %v629 = vadd.f32 %v487, %v628
      %v630 = vpop.f32.mrb[0].mxu0
      %631 = vmatprep.mubr.f32.mxu0 0.0
      %632 = vmatmul.mubr.f32.gmra.mrb[0].mxu0 %v508
      %v633 = vpop.f32.mrb[0].mxu0
      %v634 = vadd.f32 %v487, %v633
      %v635 = vpop.f32.mrb[0].mxu0
      %636 = vmatprep.mubr.f32.mxu0 0.0
      %637 = vmatmul.mubr.f32.gmra.mrb[0].mxu0 %v511
      %v638 = vpop.f32.mrb[0].mxu0
      %v639 = vadd.f32 %v487, %v638
      %v640 = vpop.f32.mrb[0].mxu0
      %641 = vmatprep.mubr.f32.mxu0 0.0
      %642 = vmatmul.mubr.f32.gmra.mrb[0].mxu0 %v514
      %v643 = vpop.f32.mrb[0].mxu0
      %v644 = vadd.f32 %v487, %v643
      %v645 = vpop.f32.mrb[0].mxu0
      %646 = vmatprep.mubr.f32.mxu0 0.0
      %647 = vmatmul.mubr.f32.gmra.mrb[0].mxu0 %v517
      %v648 = vpop.f32.mrb[0].mxu0
      %v649 = vadd.f32 %v487, %v648
      %v650 = vpop.f32.mrb[0].mxu0
      %651 = vmatprep.mubr.f32.mxu0 0.0
      %652 = vmatmul.mubr.f32.gmra.mrb[0].mxu0 %v520
      %v653 = vpop.f32.mrb[0].mxu0
      %v654 = vadd.f32 %v487, %v653
      %v655 = vpop.f32.mrb[0].mxu0
      %656 = vmatprep.mubr.f32.mxu0 0.0
      %657 = vmatmul.mubr.f32.gmra.mrb[0].mxu0 %v523
      %v658 = vpop.f32.mrb[0].mxu0
      %v659 = vadd.f32 %v487, %v658
      %v660 = vpop.f32.mrb[0].mxu0
      %661 = vmatprep.mubr.f32.mxu0 0.0
      %662 = vmatmul.mubr.f32.gmra.mrb[0].mxu0 %v526
      %v663 = vpop.f32.mrb[0].mxu0
      %v664 = vadd.f32 %v487, %v663
      %v665 = vpop.f32.mrb[0].mxu0
      %666 = vmatprep.mubr.f32.mxu0 0.0
      %667 = vmatmul.mubr.f32.gmra.mrb[0].mxu0 %v529
      %v668 = vpop.f32.mrb[0].mxu0
      %v669 = vadd.f32 %v487, %v668
      %v670 = vpop.f32.mrb[0].mxu0
      %671 = vmatprep.mubr.f32.mxu0 0.0
      %672 = vmatmul.mubr.f32.gmra.mrb[0].mxu0 %v532
      %v673 = vpop.f32.mrb[0].mxu0
      %v674 = vadd.f32 %v487, %v673
      %v675 = vpop.f32.mrb[0].mxu0
      %676 = vmatprep.mubr.f32.mxu0 0.0
      %677 = vmatmul.mubr.f32.gmra.mrb[0].mxu0 %v535
      %v678 = vpop.f32.mrb[0].mxu0
      %v679 = vadd.f32 %v487, %v678
      %v680 = vpop.f32.mrb[0].mxu0
      %681 = vdwg.mxu0
      %v682 = vsub.f32 0.0, %v644
      %v683 = vsub.f32 0.0, %v649
      %v684 = vsub.f32 0.0, %v654
      %v685 = vsub.f32 0.0, %v659
      %v686 = vsub.f32 0.0, %v664
      %v687 = vsub.f32 0.0, %v669
      %v688 = vsub.f32 0.0, %v674
      %v689 = vsub.f32 0.0, %v679
      %v690 = vmul.f32 %v682, 1.442695
      %v691 = vpow.pop %v690
      %v692 = vmul.f32 %v683, 1.442695
      %v693 = vpow.pop %v692
      %v694 = vmul.f32 %v684, 1.442695
      %v695 = vpow.pop %v694
      %v696 = vmul.f32 %v685, 1.442695
      %v697 = vpow.pop %v696
      %v698 = vmul.f32 %v686, 1.442695
      %v699 = vpow.pop %v698
      %v700 = vmul.f32 %v687, 1.442695
      %v701 = vpow.pop %v700
      %v702 = vmul.f32 %v688, 1.442695
      %v703 = vpow.pop %v702
      %v704 = vmul.f32 %v689, 1.442695
      %v705 = vpow.pop %v704
      %v706 = vadd.f32 %v691, 1.0
      %v707 = vadd.f32 %v693, 1.0
      %v708 = vadd.f32 %v695, 1.0
      %v709 = vadd.f32 %v697, 1.0
      %v710 = vadd.f32 %v699, 1.0
      %v711 = vadd.f32 %v701, 1.0
      %v712 = vadd.f32 %v703, 1.0
      %v713 = vadd.f32 %v705, 1.0
      %v714 = vrcp.pop %v706
      %v715 = vmul.f32 1.0, %v714
      %v716 = vrcp.pop %v707
      %v717 = vmul.f32 1.0, %v716
      %v718 = vrcp.pop %v708
      %v719 = vmul.f32 1.0, %v718
      %v720 = vrcp.pop %v709
      %v721 = vmul.f32 1.0, %v720
      %v722 = vrcp.pop %v710
      %v723 = vmul.f32 1.0, %v722
      %v724 = vrcp.pop %v711
      %v725 = vmul.f32 1.0, %v724
      %v726 = vrcp.pop %v712
      %v727 = vmul.f32 1.0, %v726
      %v728 = vrcp.pop %v713
      %v729 = vmul.f32 1.0, %v728
      %v730 = vlaneseq
      %v731 = vand.u32 %v730, 127
      %v732 = vmul.f32 %v604, %v715
      %v733 = vmul.f32 %v609, %v717
      %v734 = vmul.f32 %v614, %v719
      %v735 = vmul.f32 %v619, %v721
      %v736 = vmul.f32 %v624, %v723
      %v737 = vmul.f32 %v629, %v725
      %v738 = vmul.f32 %v634, %v727
      %v739 = vmul.f32 %v639, %v729
      %vm740 = vcmp.lt.s32.totalorder %v731, 32
      %v741 = vsel %vm740, %v604, %v715
      %v742 = vsel %vm740, %v609, %v717
      %v743 = vsel %vm740, %v614, %v719
      %v744 = vsel %vm740, %v619, %v721
      %v745 = vsel %vm740, %v624, %v723
      %v746 = vsel %vm740, %v629, %v725
      %v747 = vsel %vm740, %v634, %v727
      %v748 = vsel %vm740, %v639, %v729
      %v749 = vadd.f32 %v732, %v741
      %v750 = vadd.f32 %v733, %v742
      %v751 = vadd.f32 %v734, %v743
      %v752 = vadd.f32 %v735, %v744
      %v753 = vadd.f32 %v736, %v745
      %v754 = vadd.f32 %v737, %v746
      %v755 = vadd.f32 %v738, %v747
      %v756 = vadd.f32 %v739, %v748
      %765 = vrot.lane.b32.xlu0 %v749, 96
      %v766 = vpop.permute.xlu0 %765
      %767 = vrot.lane.b32.xlu0 %v750, 96
      %v768 = vpop.permute.xlu0 %767
      %769 = vrot.lane.b32.xlu0 %v751, 96
      %v770 = vpop.permute.xlu0 %769
      %771 = vrot.lane.b32.xlu0 %v752, 96
      %v772 = vpop.permute.xlu0 %771
      %773 = vrot.lane.b32.xlu0 %v753, 96
      %v774 = vpop.permute.xlu0 %773
      %775 = vrot.lane.b32.xlu0 %v754, 96
      %v776 = vpop.permute.xlu0 %775
      %777 = vrot.lane.b32.xlu0 %v755, 96
      %v778 = vpop.permute.xlu0 %777
      %779 = vrot.lane.b32.xlu0 %v756, 96
      %v780 = vpop.permute.xlu0 %779
      %vm781 = vcmask 64512
      %v782 = vsel %vm781, %v749, 0
      %v784 = vsel %vm781, %v750, 0
      %v786 = vsel %vm781, %v751, 0
      %v788 = vsel %vm781, %v752, 0
      %v790 = vsel %vm781, %v753, 0
      %v792 = vsel %vm781, %v754, 0
      %v794 = vsel %vm781, %v755, 0
      %v796 = vsel %vm781, %v756, 0
      %v798 = vsel %vm781, %v766, 0
      %v800 = vsel %vm781, %v768, 0
      %v802 = vsel %vm781, %v770, 0
      %v804 = vsel %vm781, %v772, 0
      %v806 = vsel %vm781, %v774, 0
      %v808 = vsel %vm781, %v776, 0
      %v810 = vsel %vm781, %v778, 0
      %v812 = vsel %vm781, %v780, 0
      %814 = vmatprep.subr.mxu0 0.0
      %815 = vmatpush1.xpose.msra.mxu0 %v798
      %816 = vmatprep.subr.mxu0 0.0
      %817 = vmatpush1.xpose.msra.mxu0 %v800
      %818 = vmatprep.subr.mxu0 0.0
      %819 = vmatpush1.xpose.msra.mxu0 %v802
      %820 = vmatprep.subr.mxu0 0.0
      %821 = vmatpush1.xpose.msra.mxu0 %v804
      %822 = vmatprep.subr.mxu0 0.0
      %823 = vmatpush1.xpose.msra.mxu0 %v806
      %824 = vmatprep.subr.mxu0 0.0
      %825 = vmatpush1.xpose.msra.mxu0 %v808
      %826 = vmatprep.subr.mxu0 0.0
      %827 = vmatpush1.xpose.msra.mxu0 %v810
      %828 = vmatprep.subr.mxu0 0.0
      %829 = vmatpush1.xpose.msra.mxu0 %v812
      %830 = vmatprep.subr.mxu0 0.0
      %831 = vmatpush1.xpose.msra.mxu0 0.0
      %832 = vmatprep.subr.mxu0 0.0
      %833 = vmatpush1.xpose.msra.mxu0 0.0
      %834 = vmatprep.subr.mxu0 0.0
      %835 = vmatpush1.xpose.msra.mxu0 0.0
      %836 = vmatprep.subr.mxu0 0.0
      %837 = vmatpush1.xpose.msra.mxu0 0.0
      %838 = vmatprep.subr.mxu0 0.0
      %839 = vmatpush1.xpose.msra.mxu0 0.0
      %840 = vmatprep.subr.mxu0 0.0
      %841 = vmatpush1.xpose.msra.mxu0 0.0
      %842 = vmatprep.subr.mxu0 0.0
      %843 = vmatpush1.xpose.msra.mxu0 0.0
      %844 = vmatprep.subr.mxu0 0.0
      %845 = vmatpush1.xpose.msra.mxu0 0.0
      %846 = vmatprep.subr.mxu0 0.0
      %847 = vmatpush1.xpose.msra.mxu0 0.0
      %848 = vmatprep.subr.mxu0 0.0
      %849 = vmatpush1.xpose.msra.mxu0 0.0
      %850 = vmatprep.subr.mxu0 0.0
      %851 = vmatpush1.xpose.msra.mxu0 0.0
      %852 = vmatprep.subr.mxu0 0.0
      %853 = vmatpush1.xpose.msra.mxu0 0.0
      %854 = vmatprep.subr.mxu0 0.0
      %855 = vmatpush1.xpose.msra.mxu0 0.0
      %856 = vmatprep.subr.mxu0 0.0
      %857 = vmatpush1.xpose.msra.mxu0 0.0
      %858 = vmatprep.subr.mxu0 0.0
      %859 = vmatpush1.xpose.msra.mxu0 0.0
      %860 = vmatprep.subr.mxu0 0.0
      %861 = vmatpush1.xpose.msra.mxu0 0.0
      %862 = vmatprep.subr.mxu0 0.0
      %863 = vmatpush1.xpose.msra.mxu0 0.0
      %864 = vmatprep.subr.mxu0 0.0
      %865 = vmatpush1.xpose.msra.mxu0 0.0
      %866 = vmatprep.subr.mxu0 0.0
      %867 = vmatpush1.xpose.msra.mxu0 0.0
      %868 = vmatprep.subr.mxu0 0.0
      %869 = vmatpush1.xpose.msra.mxu0 0.0
      %870 = vmatprep.subr.mxu0 0.0
      %871 = vmatpush1.xpose.msra.mxu0 0.0
      %872 = vmatprep.subr.mxu0 0.0
      %873 = vmatpush1.xpose.msra.mxu0 0.0
      %874 = vmatprep.subr.mxu0 0.0
      %875 = vmatpush1.xpose.msra.mxu0 0.0
      %876 = vmatprep.subr.mxu0 0.0
      %877 = vmatpush1.xpose.msra.mxu0 0.0
      %878 = vmatprep.mubr.f32.mxu0 0.0
      %879 = vmatmul.mubr.f32.gmra.mrb[0].mxu0 %v782
      %v880 = vpop.f32.mrb[0].mxu0
      %v881 = vadd.f32 0.0, %v880
      %v882 = vpop.f32.mrb[0].mxu0
      %883 = vmatprep.mubr.f32.mxu0 0.0
      %884 = vmatmul.mubr.f32.gmra.mrb[0].mxu0 %v784
      %v885 = vpop.f32.mrb[0].mxu0
      %v886 = vadd.f32 0.0, %v885
      %v887 = vpop.f32.mrb[0].mxu0
      %888 = vmatprep.mubr.f32.mxu0 0.0
      %889 = vmatmul.mubr.f32.gmra.mrb[0].mxu0 %v786
      %v890 = vpop.f32.mrb[0].mxu0
      %v891 = vadd.f32 0.0, %v890
      %v892 = vpop.f32.mrb[0].mxu0
      %893 = vmatprep.mubr.f32.mxu0 0.0
      %894 = vmatmul.mubr.f32.gmra.mrb[0].mxu0 %v788
      %v895 = vpop.f32.mrb[0].mxu0
      %v896 = vadd.f32 0.0, %v895
      %v897 = vpop.f32.mrb[0].mxu0
      %898 = vmatprep.mubr.f32.mxu0 0.0
      %899 = vmatmul.mubr.f32.gmra.mrb[0].mxu0 %v790
      %v900 = vpop.f32.mrb[0].mxu0
      %v901 = vadd.f32 0.0, %v900
      %v902 = vpop.f32.mrb[0].mxu0
      %903 = vmatprep.mubr.f32.mxu0 0.0
      %904 = vmatmul.mubr.f32.gmra.mrb[0].mxu0 %v792
      %v905 = vpop.f32.mrb[0].mxu0
      %v906 = vadd.f32 0.0, %v905
      %v907 = vpop.f32.mrb[0].mxu0
      %908 = vmatprep.mubr.f32.mxu0 0.0
      %909 = vmatmul.mubr.f32.gmra.mrb[0].mxu0 %v794
      %v910 = vpop.f32.mrb[0].mxu0
      %v911 = vadd.f32 0.0, %v910
      %v912 = vpop.f32.mrb[0].mxu0
      %913 = vmatprep.mubr.f32.mxu0 0.0
      %914 = vmatmul.mubr.f32.gmra.mrb[0].mxu0 %v796
      %v915 = vpop.f32.mrb[0].mxu0
      %v916 = vadd.f32 0.0, %v915
      %v917 = vpop.f32.mrb[0].mxu0
      %918 = vdwg.mxu0
      %v919 = vmul.f32 %v881, 0.35355338
      %v920 = vmul.f32 %v886, 0.35355338
      %v921 = vmul.f32 %v891, 0.35355338
      %v922 = vmul.f32 %v896, 0.35355338
      %v923 = vmul.f32 %v901, 0.35355338
      %v924 = vmul.f32 %v906, 0.35355338
      %v925 = vmul.f32 %v911, 0.35355338
      %v926 = vmul.f32 %v916, 0.35355338
      %vm927 = vcmask 523264
      %v928 = vsel %vm927, %v919, -inf
      %929 = vmax.xlane.f32.xlu0 %v928
      %v930 = vpop.xlane.xlu0 %929
      %v931 = vsel %vm927, %v920, -inf
      %932 = vmax.xlane.f32.xlu0 %v931
      %v933 = vpop.xlane.xlu0 %932
      %v934 = vsel %vm927, %v921, -inf
      %935 = vmax.xlane.f32.xlu0 %v934
      %v936 = vpop.xlane.xlu0 %935
      %v937 = vsel %vm927, %v922, -inf
      %938 = vmax.xlane.f32.xlu0 %v937
      %v939 = vpop.xlane.xlu0 %938
      %v940 = vsel %vm927, %v923, -inf
      %941 = vmax.xlane.f32.xlu0 %v940
      %v942 = vpop.xlane.xlu0 %941
      %v943 = vsel %vm927, %v924, -inf
      %944 = vmax.xlane.f32.xlu0 %v943
      %v945 = vpop.xlane.xlu0 %944
      %v946 = vsel %vm927, %v925, -inf
      %947 = vmax.xlane.f32.xlu0 %v946
      %v948 = vpop.xlane.xlu0 %947
      %v949 = vsel %vm927, %v926, -inf
      %950 = vmax.xlane.f32.xlu0 %v949
      %v951 = vpop.xlane.xlu0 %950
      %v952 = vsub.f32 %v919, %v930
      %v953 = vsub.f32 %v920, %v933
      %v954 = vsub.f32 %v921, %v936
      %v955 = vsub.f32 %v922, %v939
      %v956 = vsub.f32 %v923, %v942
      %v957 = vsub.f32 %v924, %v945
      %v958 = vsub.f32 %v925, %v948
      %v959 = vsub.f32 %v926, %v951
      %v960 = vmul.f32 %v952, 1.442695
      %v961 = vpow.pop %v960
      %v962 = vmul.f32 %v953, 1.442695
      %v963 = vpow.pop %v962
      %v964 = vmul.f32 %v954, 1.442695
      %v965 = vpow.pop %v964
      %v966 = vmul.f32 %v955, 1.442695
      %v967 = vpow.pop %v966
      %v968 = vmul.f32 %v956, 1.442695
      %v969 = vpow.pop %v968
      %v970 = vmul.f32 %v957, 1.442695
      %v971 = vpow.pop %v970
      %v972 = vmul.f32 %v958, 1.442695
      %v973 = vpow.pop %v972
      %v974 = vmul.f32 %v959, 1.442695
      %v975 = vpow.pop %v974
      %v976 = vsel %vm927, %v961, 0.0
      %977 = vadd.xlane.f32.xlu0 %v976
      %v978 = vpop.xlane.xlu0 %977
      %v979 = vsel %vm927, %v963, 0.0
      %980 = vadd.xlane.f32.xlu0 %v979
      %v981 = vpop.xlane.xlu0 %980
      %v982 = vsel %vm927, %v965, 0.0
      %983 = vadd.xlane.f32.xlu0 %v982
      %v984 = vpop.xlane.xlu0 %983
      %v985 = vsel %vm927, %v967, 0.0
      %986 = vadd.xlane.f32.xlu0 %v985
      %v987 = vpop.xlane.xlu0 %986
      %v988 = vsel %vm927, %v969, 0.0
      %989 = vadd.xlane.f32.xlu0 %v988
      %v990 = vpop.xlane.xlu0 %989
      %v991 = vsel %vm927, %v971, 0.0
      %992 = vadd.xlane.f32.xlu0 %v991
      %v993 = vpop.xlane.xlu0 %992
      %v994 = vsel %vm927, %v973, 0.0
      %995 = vadd.xlane.f32.xlu0 %v994
      %v996 = vpop.xlane.xlu0 %995
      %v997 = vsel %vm927, %v975, 0.0
      %998 = vadd.xlane.f32.xlu0 %v997
      %v999 = vpop.xlane.xlu0 %998
      %v1000 = vrcp.pop %v978
      %v1001 = vmul.f32 %v961, %v1000
      %v1002 = vrcp.pop %v981
      %v1003 = vmul.f32 %v963, %v1002
      %v1004 = vrcp.pop %v984
      %v1005 = vmul.f32 %v965, %v1004
      %v1006 = vrcp.pop %v987
      %v1007 = vmul.f32 %v967, %v1006
      %v1008 = vrcp.pop %v990
      %v1009 = vmul.f32 %v969, %v1008
      %v1010 = vrcp.pop %v993
      %v1011 = vmul.f32 %v971, %v1010
      %v1012 = vrcp.pop %v996
      %v1013 = vmul.f32 %v973, %v1012
      %v1014 = vrcp.pop %v999
      %v1015 = vmul.f32 %v975, %v1014
      %1016 = vrot.lane.b32.xlu0 %v749, 64
      %v1017 = vpop.permute.xlu0 %1016
      %1018 = vrot.lane.b32.xlu0 %v750, 64
      %v1019 = vpop.permute.xlu0 %1018
      %1020 = vrot.lane.b32.xlu0 %v751, 64
      %v1021 = vpop.permute.xlu0 %1020
      %1022 = vrot.lane.b32.xlu0 %v752, 64
      %v1023 = vpop.permute.xlu0 %1022
      %1024 = vrot.lane.b32.xlu0 %v753, 64
      %v1025 = vpop.permute.xlu0 %1024
      %1026 = vrot.lane.b32.xlu0 %v754, 64
      %v1027 = vpop.permute.xlu0 %1026
      %1028 = vrot.lane.b32.xlu0 %v755, 64
      %v1029 = vpop.permute.xlu0 %1028
      %1030 = vrot.lane.b32.xlu0 %v756, 64
      %v1031 = vpop.permute.xlu0 %1030
      %v1041 = vsel %vm927, %v1001, 0
      %v1044 = vsel %vm927, %v1003, 0
      %v1047 = vsel %vm927, %v1005, 0
      %v1050 = vsel %vm927, %v1007, 0
      %v1053 = vsel %vm927, %v1009, 0
      %v1056 = vsel %vm927, %v1011, 0
      %v1059 = vsel %vm927, %v1013, 0
      %v1062 = vsel %vm927, %v1015, 0
      %1064 = vmatprep.subr.mxu0 0.0
      %1065 = vmatpush1.msra.mxu0 %v1017
      %1066 = vmatprep.subr.mxu0 0.0
      %1067 = vmatpush1.msra.mxu0 %v1019
      %1068 = vmatprep.subr.mxu0 0.0
      %1069 = vmatpush1.msra.mxu0 %v1021
      %1070 = vmatprep.subr.mxu0 0.0
      %1071 = vmatpush1.msra.mxu0 %v1023
      %1072 = vmatprep.subr.mxu0 0.0
      %1073 = vmatpush1.msra.mxu0 %v1025
      %1074 = vmatprep.subr.mxu0 0.0
      %1075 = vmatpush1.msra.mxu0 %v1027
      %1076 = vmatprep.subr.mxu0 0.0
      %1077 = vmatpush1.msra.mxu0 %v1029
      %1078 = vmatprep.subr.mxu0 0.0
      %1079 = vmatpush1.msra.mxu0 %v1031
      %1080 = vmatprep.subr.mxu0 0.0
      %1081 = vmatpush1.msra.mxu0 0.0
      %1082 = vmatprep.subr.mxu0 0.0
      %1083 = vmatpush1.msra.mxu0 0.0
      %1084 = vmatprep.subr.mxu0 0.0
      %1085 = vmatpush1.msra.mxu0 0.0
      %1086 = vmatprep.subr.mxu0 0.0
      %1087 = vmatpush1.msra.mxu0 0.0
      %1088 = vmatprep.subr.mxu0 0.0
      %1089 = vmatpush1.msra.mxu0 0.0
      %1090 = vmatprep.subr.mxu0 0.0
      %1091 = vmatpush1.msra.mxu0 0.0
      %1092 = vmatprep.subr.mxu0 0.0
      %1093 = vmatpush1.msra.mxu0 0.0
      %1094 = vmatprep.subr.mxu0 0.0
      %1095 = vmatpush1.msra.mxu0 0.0
      %1096 = vmatprep.subr.mxu0 0.0
      %1097 = vmatpush1.msra.mxu0 0.0
      %1098 = vmatprep.subr.mxu0 0.0
      %1099 = vmatpush1.msra.mxu0 0.0
      %1100 = vmatprep.subr.mxu0 0.0
      %1101 = vmatpush1.msra.mxu0 0.0
      %1102 = vmatprep.subr.mxu0 0.0
      %1103 = vmatpush1.msra.mxu0 0.0
      %1104 = vmatprep.subr.mxu0 0.0
      %1105 = vmatpush1.msra.mxu0 0.0
      %1106 = vmatprep.subr.mxu0 0.0
      %1107 = vmatpush1.msra.mxu0 0.0
      %1108 = vmatprep.subr.mxu0 0.0
      %1109 = vmatpush1.msra.mxu0 0.0
      %1110 = vmatprep.subr.mxu0 0.0
      %1111 = vmatpush1.msra.mxu0 0.0
      %1112 = vmatprep.subr.mxu0 0.0
      %1113 = vmatpush1.msra.mxu0 0.0
      %1114 = vmatprep.subr.mxu0 0.0
      %1115 = vmatpush1.msra.mxu0 0.0
      %1116 = vmatprep.subr.mxu0 0.0
      %1117 = vmatpush1.msra.mxu0 0.0
      %1118 = vmatprep.subr.mxu0 0.0
      %1119 = vmatpush1.msra.mxu0 0.0
      %1120 = vmatprep.subr.mxu0 0.0
      %1121 = vmatpush1.msra.mxu0 0.0
      %1122 = vmatprep.subr.mxu0 0.0
      %1123 = vmatpush1.msra.mxu0 0.0
      %1124 = vmatprep.subr.mxu0 0.0
      %1125 = vmatpush1.msra.mxu0 0.0
      %1126 = vmatprep.subr.mxu0 0.0
      %1127 = vmatpush1.msra.mxu0 0.0
      %1128 = vmatprep.mubr.f32.mxu0 0.0
      %1129 = vmatmul.mubr.f32.gmra.mrb[0].mxu0 %v1041
      %v1130 = vpop.f32.mrb[0].mxu0
      %v1131 = vadd.f32 0.0, %v1130
      %v1132 = vpop.f32.mrb[0].mxu0
      %1133 = vmatprep.mubr.f32.mxu0 0.0
      %1134 = vmatmul.mubr.f32.gmra.mrb[0].mxu0 %v1044
      %v1135 = vpop.f32.mrb[0].mxu0
      %v1136 = vadd.f32 0.0, %v1135
      %v1137 = vpop.f32.mrb[0].mxu0
      %1138 = vmatprep.mubr.f32.mxu0 0.0
      %1139 = vmatmul.mubr.f32.gmra.mrb[0].mxu0 %v1047
      %v1140 = vpop.f32.mrb[0].mxu0
      %v1141 = vadd.f32 0.0, %v1140
      %v1142 = vpop.f32.mrb[0].mxu0
      %1143 = vmatprep.mubr.f32.mxu0 0.0
      %1144 = vmatmul.mubr.f32.gmra.mrb[0].mxu0 %v1050
      %v1145 = vpop.f32.mrb[0].mxu0
      %v1146 = vadd.f32 0.0, %v1145
      %v1147 = vpop.f32.mrb[0].mxu0
      %1148 = vmatprep.mubr.f32.mxu0 0.0
      %1149 = vmatmul.mubr.f32.gmra.mrb[0].mxu0 %v1053
      %v1150 = vpop.f32.mrb[0].mxu0
      %v1151 = vadd.f32 0.0, %v1150
      %v1152 = vpop.f32.mrb[0].mxu0
      %1153 = vmatprep.mubr.f32.mxu0 0.0
      %1154 = vmatmul.mubr.f32.gmra.mrb[0].mxu0 %v1056
      %v1155 = vpop.f32.mrb[0].mxu0
      %v1156 = vadd.f32 0.0, %v1155
      %v1157 = vpop.f32.mrb[0].mxu0
      %1158 = vmatprep.mubr.f32.mxu0 0.0
      %1159 = vmatmul.mubr.f32.gmra.mrb[0].mxu0 %v1059
      %v1160 = vpop.f32.mrb[0].mxu0
      %v1161 = vadd.f32 0.0, %v1160
      %v1162 = vpop.f32.mrb[0].mxu0
      %1163 = vmatprep.mubr.f32.mxu0 0.0
      %1164 = vmatmul.mubr.f32.gmra.mrb[0].mxu0 %v1062
      %v1165 = vpop.f32.mrb[0].mxu0
      %v1166 = vadd.f32 0.0, %v1165
      %v1167 = vpop.f32.mrb[0].mxu0
      %1168 = vdwg.mxu0
      %v1169 = vld [vmem:[%s6] sm:$0xff]
      %1170 = vrot.lane.b32.xlu0 %v749, 120
      %v1171 = vpop.permute.xlu0 %1170
      %1172 = vrot.lane.b32.xlu0 %v750, 120
      %v1173 = vpop.permute.xlu0 %1172
      %1174 = vrot.lane.b32.xlu0 %v751, 120
      %v1175 = vpop.permute.xlu0 %1174
      %1176 = vrot.lane.b32.xlu0 %v752, 120
      %v1177 = vpop.permute.xlu0 %1176
      %1178 = vrot.lane.b32.xlu0 %v753, 120
      %v1179 = vpop.permute.xlu0 %1178
      %1180 = vrot.lane.b32.xlu0 %v754, 120
      %v1181 = vpop.permute.xlu0 %1180
      %1182 = vrot.lane.b32.xlu0 %v755, 120
      %v1183 = vpop.permute.xlu0 %1182
      %1184 = vrot.lane.b32.xlu0 %v756, 120
      %v1185 = vpop.permute.xlu0 %1184
      %1186 = vrot.lane.b32.xlu0 %v749, 88
      %v1187 = vpop.permute.xlu0 %1186
      %1188 = vrot.lane.b32.xlu0 %v750, 88
      %v1189 = vpop.permute.xlu0 %1188
      %1190 = vrot.lane.b32.xlu0 %v751, 88
      %v1191 = vpop.permute.xlu0 %1190
      %1192 = vrot.lane.b32.xlu0 %v752, 88
      %v1193 = vpop.permute.xlu0 %1192
      %1194 = vrot.lane.b32.xlu0 %v753, 88
      %v1195 = vpop.permute.xlu0 %1194
      %1196 = vrot.lane.b32.xlu0 %v754, 88
      %v1197 = vpop.permute.xlu0 %1196
      %1198 = vrot.lane.b32.xlu0 %v755, 88
      %v1199 = vpop.permute.xlu0 %1198
      %1200 = vrot.lane.b32.xlu0 %v756, 88
      %v1201 = vpop.permute.xlu0 %1200
      %v1202 = vsel %vm781, %v1171, 0
      %v1204 = vsel %vm781, %v1173, 0
      %v1206 = vsel %vm781, %v1175, 0
      %v1208 = vsel %vm781, %v1177, 0
      %v1210 = vsel %vm781, %v1179, 0
      %v1212 = vsel %vm781, %v1181, 0
      %v1214 = vsel %vm781, %v1183, 0
      %v1216 = vsel %vm781, %v1185, 0
      %v1218 = vsel %vm781, %v1187, 0
      %v1220 = vsel %vm781, %v1189, 0
      %v1222 = vsel %vm781, %v1191, 0
      %v1224 = vsel %vm781, %v1193, 0
      %v1226 = vsel %vm781, %v1195, 0
      %v1228 = vsel %vm781, %v1197, 0
      %v1230 = vsel %vm781, %v1199, 0
      %v1232 = vsel %vm781, %v1201, 0
      %1234 = vmatprep.subr.mxu0 0.0
      %1235 = vmatpush1.xpose.msra.mxu0 %v1218
      %1236 = vmatprep.subr.mxu0 0.0
      %1237 = vmatpush1.xpose.msra.mxu0 %v1220
      %1238 = vmatprep.subr.mxu0 0.0
      %1239 = vmatpush1.xpose.msra.mxu0 %v1222
      %1240 = vmatprep.subr.mxu0 0.0
      %1241 = vmatpush1.xpose.msra.mxu0 %v1224
      %1242 = vmatprep.subr.mxu0 0.0
      %1243 = vmatpush1.xpose.msra.mxu0 %v1226
      %1244 = vmatprep.subr.mxu0 0.0
      %1245 = vmatpush1.xpose.msra.mxu0 %v1228
      %1246 = vmatprep.subr.mxu0 0.0
      %1247 = vmatpush1.xpose.msra.mxu0 %v1230
      %1248 = vmatprep.subr.mxu0 0.0
      %1249 = vmatpush1.xpose.msra.mxu0 %v1232
      %1250 = vmatprep.subr.mxu0 0.0
      %1251 = vmatpush1.xpose.msra.mxu0 0.0
      %1252 = vmatprep.subr.mxu0 0.0
      %1253 = vmatpush1.xpose.msra.mxu0 0.0
      %1254 = vmatprep.subr.mxu0 0.0
      %1255 = vmatpush1.xpose.msra.mxu0 0.0
      %1256 = vmatprep.subr.mxu0 0.0
      %1257 = vmatpush1.xpose.msra.mxu0 0.0
      %1258 = vmatprep.subr.mxu0 0.0
      %1259 = vmatpush1.xpose.msra.mxu0 0.0
      %1260 = vmatprep.subr.mxu0 0.0
      %1261 = vmatpush1.xpose.msra.mxu0 0.0
      %1262 = vmatprep.subr.mxu0 0.0
      %1263 = vmatpush1.xpose.msra.mxu0 0.0
      %1264 = vmatprep.subr.mxu0 0.0
      %1265 = vmatpush1.xpose.msra.mxu0 0.0
      %1266 = vmatprep.subr.mxu0 0.0
      %1267 = vmatpush1.xpose.msra.mxu0 0.0
      %1268 = vmatprep.subr.mxu0 0.0
      %1269 = vmatpush1.xpose.msra.mxu0 0.0
      %1270 = vmatprep.subr.mxu0 0.0
      %1271 = vmatpush1.xpose.msra.mxu0 0.0
      %1272 = vmatprep.subr.mxu0 0.0
      %1273 = vmatpush1.xpose.msra.mxu0 0.0
      %1274 = vmatprep.subr.mxu0 0.0
      %1275 = vmatpush1.xpose.msra.mxu0 0.0
      %1276 = vmatprep.subr.mxu0 0.0
      %1277 = vmatpush1.xpose.msra.mxu0 0.0
      %1278 = vmatprep.subr.mxu0 0.0
      %1279 = vmatpush1.xpose.msra.mxu0 0.0
      %1280 = vmatprep.subr.mxu0 0.0
      %1281 = vmatpush1.xpose.msra.mxu0 0.0
      %1282 = vmatprep.subr.mxu0 0.0
      %1283 = vmatpush1.xpose.msra.mxu0 0.0
      %1284 = vmatprep.subr.mxu0 0.0
      %1285 = vmatpush1.xpose.msra.mxu0 0.0
      %1286 = vmatprep.subr.mxu0 0.0
      %1287 = vmatpush1.xpose.msra.mxu0 0.0
      %1288 = vmatprep.subr.mxu0 0.0
      %1289 = vmatpush1.xpose.msra.mxu0 0.0
      %1290 = vmatprep.subr.mxu0 0.0
      %1291 = vmatpush1.xpose.msra.mxu0 0.0
      %1292 = vmatprep.subr.mxu0 0.0
      %1293 = vmatpush1.xpose.msra.mxu0 0.0
      %1294 = vmatprep.subr.mxu0 0.0
      %1295 = vmatpush1.xpose.msra.mxu0 0.0
      %1296 = vmatprep.subr.mxu0 0.0
      %1297 = vmatpush1.xpose.msra.mxu0 0.0
      %1298 = vmatprep.mubr.f32.mxu0 0.0
      %1299 = vmatmul.mubr.f32.gmra.mrb[0].mxu0 %v1202
      %v1300 = vpop.f32.mrb[0].mxu0
      %v1301 = vadd.f32 0.0, %v1300
      %v1302 = vpop.f32.mrb[0].mxu0
      %1303 = vmatprep.mubr.f32.mxu0 0.0
      %1304 = vmatmul.mubr.f32.gmra.mrb[0].mxu0 %v1204
      %v1305 = vpop.f32.mrb[0].mxu0
      %v1306 = vadd.f32 0.0, %v1305
      %v1307 = vpop.f32.mrb[0].mxu0
      %1308 = vmatprep.mubr.f32.mxu0 0.0
      %1309 = vmatmul.mubr.f32.gmra.mrb[0].mxu0 %v1206
      %v1310 = vpop.f32.mrb[0].mxu0
      %v1311 = vadd.f32 0.0, %v1310
      %v1312 = vpop.f32.mrb[0].mxu0
      %1313 = vmatprep.mubr.f32.mxu0 0.0
      %1314 = vmatmul.mubr.f32.gmra.mrb[0].mxu0 %v1208
      %v1315 = vpop.f32.mrb[0].mxu0
      %v1316 = vadd.f32 0.0, %v1315
      %v1317 = vpop.f32.mrb[0].mxu0
      %1318 = vmatprep.mubr.f32.mxu0 0.0
      %1319 = vmatmul.mubr.f32.gmra.mrb[0].mxu0 %v1210
      %v1320 = vpop.f32.mrb[0].mxu0
      %v1321 = vadd.f32 0.0, %v1320
      %v1322 = vpop.f32.mrb[0].mxu0
      %1323 = vmatprep.mubr.f32.mxu0 0.0
      %1324 = vmatmul.mubr.f32.gmra.mrb[0].mxu0 %v1212
      %v1325 = vpop.f32.mrb[0].mxu0
      %v1326 = vadd.f32 0.0, %v1325
      %v1327 = vpop.f32.mrb[0].mxu0
      %1328 = vmatprep.mubr.f32.mxu0 0.0
      %1329 = vmatmul.mubr.f32.gmra.mrb[0].mxu0 %v1214
      %v1330 = vpop.f32.mrb[0].mxu0
      %v1331 = vadd.f32 0.0, %v1330
      %v1332 = vpop.f32.mrb[0].mxu0
      %1333 = vmatprep.mubr.f32.mxu0 0.0
      %1334 = vmatmul.mubr.f32.gmra.mrb[0].mxu0 %v1216
      %v1335 = vpop.f32.mrb[0].mxu0
      %v1336 = vadd.f32 0.0, %v1335
      %v1337 = vpop.f32.mrb[0].mxu0
      %1338 = vdwg.mxu0
      %v1339 = vmul.f32 %v1301, 0.35355338
      %v1340 = vmul.f32 %v1306, 0.35355338
      %v1341 = vmul.f32 %v1311, 0.35355338
      %v1342 = vmul.f32 %v1316, 0.35355338
      %v1343 = vmul.f32 %v1321, 0.35355338
      %v1344 = vmul.f32 %v1326, 0.35355338
      %v1345 = vmul.f32 %v1331, 0.35355338
      %v1346 = vmul.f32 %v1336, 0.35355338
      %v1347 = vsel %vm927, %v1339, -inf
      %1348 = vmax.xlane.f32.xlu0 %v1347
      %v1349 = vpop.xlane.xlu0 %1348
      %v1350 = vsel %vm927, %v1340, -inf
      %1351 = vmax.xlane.f32.xlu0 %v1350
      %v1352 = vpop.xlane.xlu0 %1351
      %v1353 = vsel %vm927, %v1341, -inf
      %1354 = vmax.xlane.f32.xlu0 %v1353
      %v1355 = vpop.xlane.xlu0 %1354
      %v1356 = vsel %vm927, %v1342, -inf
      %1357 = vmax.xlane.f32.xlu0 %v1356
      %v1358 = vpop.xlane.xlu0 %1357
      %v1359 = vsel %vm927, %v1343, -inf
      %1360 = vmax.xlane.f32.xlu0 %v1359
      %v1361 = vpop.xlane.xlu0 %1360
      %v1362 = vsel %vm927, %v1344, -inf
      %1363 = vmax.xlane.f32.xlu0 %v1362
      %v1364 = vpop.xlane.xlu0 %1363
      %v1365 = vsel %vm927, %v1345, -inf
      %1366 = vmax.xlane.f32.xlu0 %v1365
      %v1367 = vpop.xlane.xlu0 %1366
      %v1368 = vsel %vm927, %v1346, -inf
      %1369 = vmax.xlane.f32.xlu0 %v1368
      %v1370 = vpop.xlane.xlu0 %1369
      %v1371 = vsub.f32 %v1339, %v1349
      %v1372 = vsub.f32 %v1340, %v1352
      %v1373 = vsub.f32 %v1341, %v1355
      %v1374 = vsub.f32 %v1342, %v1358
      %v1375 = vsub.f32 %v1343, %v1361
      %v1376 = vsub.f32 %v1344, %v1364
      %v1377 = vsub.f32 %v1345, %v1367
      %v1378 = vsub.f32 %v1346, %v1370
      %v1379 = vmul.f32 %v1371, 1.442695
      %v1380 = vpow.pop %v1379
      %v1381 = vmul.f32 %v1372, 1.442695
      %v1382 = vpow.pop %v1381
      %v1383 = vmul.f32 %v1373, 1.442695
      %v1384 = vpow.pop %v1383
      %v1385 = vmul.f32 %v1374, 1.442695
      %v1386 = vpow.pop %v1385
      %v1387 = vmul.f32 %v1375, 1.442695
      %v1388 = vpow.pop %v1387
      %v1389 = vmul.f32 %v1376, 1.442695
      %v1390 = vpow.pop %v1389
      %v1391 = vmul.f32 %v1377, 1.442695
      %v1392 = vpow.pop %v1391
      %v1393 = vmul.f32 %v1378, 1.442695
      %v1394 = vpow.pop %v1393
      %v1395 = vsel %vm927, %v1380, 0.0
      %1396 = vadd.xlane.f32.xlu0 %v1395
      %v1397 = vpop.xlane.xlu0 %1396
      %v1398 = vsel %vm927, %v1382, 0.0
      %1399 = vadd.xlane.f32.xlu0 %v1398
      %v1400 = vpop.xlane.xlu0 %1399
      %v1401 = vsel %vm927, %v1384, 0.0
      %1402 = vadd.xlane.f32.xlu0 %v1401
      %v1403 = vpop.xlane.xlu0 %1402
      %v1404 = vsel %vm927, %v1386, 0.0
      %1405 = vadd.xlane.f32.xlu0 %v1404
      %v1406 = vpop.xlane.xlu0 %1405
      %v1407 = vsel %vm927, %v1388, 0.0
      %1408 = vadd.xlane.f32.xlu0 %v1407
      %v1409 = vpop.xlane.xlu0 %1408
      %v1410 = vsel %vm927, %v1390, 0.0
      %1411 = vadd.xlane.f32.xlu0 %v1410
      %v1412 = vpop.xlane.xlu0 %1411
      %v1413 = vsel %vm927, %v1392, 0.0
      %1414 = vadd.xlane.f32.xlu0 %v1413
      %v1415 = vpop.xlane.xlu0 %1414
      %v1416 = vsel %vm927, %v1394, 0.0
      %1417 = vadd.xlane.f32.xlu0 %v1416
      %v1418 = vpop.xlane.xlu0 %1417
      %v1419 = vrcp.pop %v1397
      %v1420 = vmul.f32 %v1380, %v1419
      %v1421 = vrcp.pop %v1400
      %v1422 = vmul.f32 %v1382, %v1421
      %v1423 = vrcp.pop %v1403
      %v1424 = vmul.f32 %v1384, %v1423
      %v1425 = vrcp.pop %v1406
      %v1426 = vmul.f32 %v1386, %v1425
      %v1427 = vrcp.pop %v1409
      %v1428 = vmul.f32 %v1388, %v1427
      %v1429 = vrcp.pop %v1412
      %v1430 = vmul.f32 %v1390, %v1429
      %v1431 = vrcp.pop %v1415
      %v1432 = vmul.f32 %v1392, %v1431
      %v1433 = vrcp.pop %v1418
      %v1434 = vmul.f32 %v1394, %v1433
      %1435 = vrot.lane.b32.xlu0 %v749, 56
      %v1436 = vpop.permute.xlu0 %1435
      %1437 = vrot.lane.b32.xlu0 %v750, 56
      %v1438 = vpop.permute.xlu0 %1437
      %1439 = vrot.lane.b32.xlu0 %v751, 56
      %v1440 = vpop.permute.xlu0 %1439
      %1441 = vrot.lane.b32.xlu0 %v752, 56
      %v1442 = vpop.permute.xlu0 %1441
      %1443 = vrot.lane.b32.xlu0 %v753, 56
      %v1444 = vpop.permute.xlu0 %1443
      %1445 = vrot.lane.b32.xlu0 %v754, 56
      %v1446 = vpop.permute.xlu0 %1445
      %1447 = vrot.lane.b32.xlu0 %v755, 56
      %v1448 = vpop.permute.xlu0 %1447
      %1449 = vrot.lane.b32.xlu0 %v756, 56
      %v1450 = vpop.permute.xlu0 %1449
      %v1460 = vsel %vm927, %v1420, 0
      %v1463 = vsel %vm927, %v1422, 0
      %v1466 = vsel %vm927, %v1424, 0
      %v1469 = vsel %vm927, %v1426, 0
      %v1472 = vsel %vm927, %v1428, 0
      %v1475 = vsel %vm927, %v1430, 0
      %v1478 = vsel %vm927, %v1432, 0
      %v1481 = vsel %vm927, %v1434, 0
      %1483 = vmatprep.subr.mxu0 0.0
      %1484 = vmatpush1.msra.mxu0 %v1436
      %1485 = vmatprep.subr.mxu0 0.0
      %1486 = vmatpush1.msra.mxu0 %v1438
      %1487 = vmatprep.subr.mxu0 0.0
      %1488 = vmatpush1.msra.mxu0 %v1440
      %1489 = vmatprep.subr.mxu0 0.0
      %1490 = vmatpush1.msra.mxu0 %v1442
      %1491 = vmatprep.subr.mxu0 0.0
      %1492 = vmatpush1.msra.mxu0 %v1444
      %1493 = vmatprep.subr.mxu0 0.0
      %1494 = vmatpush1.msra.mxu0 %v1446
      %1495 = vmatprep.subr.mxu0 0.0
      %1496 = vmatpush1.msra.mxu0 %v1448
      %1497 = vmatprep.subr.mxu0 0.0
      %1498 = vmatpush1.msra.mxu0 %v1450
      %1499 = vmatprep.subr.mxu0 0.0
      %1500 = vmatpush1.msra.mxu0 0.0
      %1501 = vmatprep.subr.mxu0 0.0
      %1502 = vmatpush1.msra.mxu0 0.0
      %1503 = vmatprep.subr.mxu0 0.0
      %1504 = vmatpush1.msra.mxu0 0.0
      %1505 = vmatprep.subr.mxu0 0.0
      %1506 = vmatpush1.msra.mxu0 0.0
      %1507 = vmatprep.subr.mxu0 0.0
      %1508 = vmatpush1.msra.mxu0 0.0
      %1509 = vmatprep.subr.mxu0 0.0
      %1510 = vmatpush1.msra.mxu0 0.0
      %1511 = vmatprep.subr.mxu0 0.0
      %1512 = vmatpush1.msra.mxu0 0.0
      %1513 = vmatprep.subr.mxu0 0.0
      %1514 = vmatpush1.msra.mxu0 0.0
      %1515 = vmatprep.subr.mxu0 0.0
      %1516 = vmatpush1.msra.mxu0 0.0
      %1517 = vmatprep.subr.mxu0 0.0
      %1518 = vmatpush1.msra.mxu0 0.0
      %1519 = vmatprep.subr.mxu0 0.0
      %1520 = vmatpush1.msra.mxu0 0.0
      %1521 = vmatprep.subr.mxu0 0.0
      %1522 = vmatpush1.msra.mxu0 0.0
      %1523 = vmatprep.subr.mxu0 0.0
      %1524 = vmatpush1.msra.mxu0 0.0
      %1525 = vmatprep.subr.mxu0 0.0
      %1526 = vmatpush1.msra.mxu0 0.0
      %1527 = vmatprep.subr.mxu0 0.0
      %1528 = vmatpush1.msra.mxu0 0.0
      %1529 = vmatprep.subr.mxu0 0.0
      %1530 = vmatpush1.msra.mxu0 0.0
      %1531 = vmatprep.subr.mxu0 0.0
      %1532 = vmatpush1.msra.mxu0 0.0
      %1533 = vmatprep.subr.mxu0 0.0
      %1534 = vmatpush1.msra.mxu0 0.0
      %1535 = vmatprep.subr.mxu0 0.0
      %1536 = vmatpush1.msra.mxu0 0.0
      %1537 = vmatprep.subr.mxu0 0.0
      %1538 = vmatpush1.msra.mxu0 0.0
      %1539 = vmatprep.subr.mxu0 0.0
      %1540 = vmatpush1.msra.mxu0 0.0
      %1541 = vmatprep.subr.mxu0 0.0
      %1542 = vmatpush1.msra.mxu0 0.0
      %1543 = vmatprep.subr.mxu0 0.0
      %1544 = vmatpush1.msra.mxu0 0.0
      %1545 = vmatprep.subr.mxu0 0.0
      %1546 = vmatpush1.msra.mxu0 0.0
      %1547 = vmatprep.mubr.f32.mxu0 0.0
      %1548 = vmatmul.mubr.f32.gmra.mrb[0].mxu0 %v1460
      %v1549 = vpop.f32.mrb[0].mxu0
      %v1550 = vadd.f32 0.0, %v1549
      %v1551 = vpop.f32.mrb[0].mxu0
      %1552 = vmatprep.mubr.f32.mxu0 0.0
      %1553 = vmatmul.mubr.f32.gmra.mrb[0].mxu0 %v1463
      %v1554 = vpop.f32.mrb[0].mxu0
      %v1555 = vadd.f32 0.0, %v1554
      %v1556 = vpop.f32.mrb[0].mxu0
      %1557 = vmatprep.mubr.f32.mxu0 0.0
      %1558 = vmatmul.mubr.f32.gmra.mrb[0].mxu0 %v1466
      %v1559 = vpop.f32.mrb[0].mxu0
      %v1560 = vadd.f32 0.0, %v1559
      %v1561 = vpop.f32.mrb[0].mxu0
      %1562 = vmatprep.mubr.f32.mxu0 0.0
      %1563 = vmatmul.mubr.f32.gmra.mrb[0].mxu0 %v1469
      %v1564 = vpop.f32.mrb[0].mxu0
      %v1565 = vadd.f32 0.0, %v1564
      %v1566 = vpop.f32.mrb[0].mxu0
      %1567 = vmatprep.mubr.f32.mxu0 0.0
      %1568 = vmatmul.mubr.f32.gmra.mrb[0].mxu0 %v1472
      %v1569 = vpop.f32.mrb[0].mxu0
      %v1570 = vadd.f32 0.0, %v1569
      %v1571 = vpop.f32.mrb[0].mxu0
      %1572 = vmatprep.mubr.f32.mxu0 0.0
      %1573 = vmatmul.mubr.f32.gmra.mrb[0].mxu0 %v1475
      %v1574 = vpop.f32.mrb[0].mxu0
      %v1575 = vadd.f32 0.0, %v1574
      %v1576 = vpop.f32.mrb[0].mxu0
      %1577 = vmatprep.mubr.f32.mxu0 0.0
      %1578 = vmatmul.mubr.f32.gmra.mrb[0].mxu0 %v1478
      %v1579 = vpop.f32.mrb[0].mxu0
      %v1580 = vadd.f32 0.0, %v1579
      %v1581 = vpop.f32.mrb[0].mxu0
      %1582 = vmatprep.mubr.f32.mxu0 0.0
      %1583 = vmatmul.mubr.f32.gmra.mrb[0].mxu0 %v1481
      %v1584 = vpop.f32.mrb[0].mxu0
      %v1585 = vadd.f32 0.0, %v1584
      %v1586 = vpop.f32.mrb[0].mxu0
      %1587 = vdwg.mxu0
      %v1588 = vld [vmem:[%s6 + $0x8] sm:$0xff]
      %v1590 = vsel %vm781, %v1550, 0
      %v1593 = vsel %vm781, %v1555, 0
      %v1596 = vsel %vm781, %v1560, 0
      %v1599 = vsel %vm781, %v1565, 0
      %v1602 = vsel %vm781, %v1570, 0
      %v1605 = vsel %vm781, %v1575, 0
      %v1608 = vsel %vm781, %v1580, 0
      %v1611 = vsel %vm781, %v1585, 0
      %1613 = vmatprep.subr.mxu0 0.0
      %1614 = vmatpush1.msra.mxu0 %v1588
      %1615 = vmatprep.subr.mxu0 0.0
      %1616 = vmatpush1.msra.mxu0 0.0
      %1617 = vmatprep.subr.mxu0 0.0
      %1618 = vmatpush1.msra.mxu0 0.0
      %1619 = vmatprep.subr.mxu0 0.0
      %1620 = vmatpush1.msra.mxu0 0.0
      %1621 = vmatprep.subr.mxu0 0.0
      %1622 = vmatpush1.msra.mxu0 0.0
      %1623 = vmatprep.subr.mxu0 0.0
      %1624 = vmatpush1.msra.mxu0 0.0
      %1625 = vmatprep.subr.mxu0 0.0
      %1626 = vmatpush1.msra.mxu0 0.0
      %1627 = vmatprep.subr.mxu0 0.0
      %1628 = vmatpush1.msra.mxu0 0.0
      %1629 = vmatprep.subr.mxu0 0.0
      %1630 = vmatpush1.msra.mxu0 0.0
      %1631 = vmatprep.subr.mxu0 0.0
      %1632 = vmatpush1.msra.mxu0 0.0
      %1633 = vmatprep.subr.mxu0 0.0
      %1634 = vmatpush1.msra.mxu0 0.0
      %1635 = vmatprep.subr.mxu0 0.0
      %1636 = vmatpush1.msra.mxu0 0.0
      %1637 = vmatprep.subr.mxu0 0.0
      %1638 = vmatpush1.msra.mxu0 0.0
      %1639 = vmatprep.subr.mxu0 0.0
      %1640 = vmatpush1.msra.mxu0 0.0
      %1641 = vmatprep.subr.mxu0 0.0
      %1642 = vmatpush1.msra.mxu0 0.0
      %1643 = vmatprep.subr.mxu0 0.0
      %1644 = vmatpush1.msra.mxu0 0.0
      %1645 = vmatprep.subr.mxu0 0.0
      %1646 = vmatpush1.msra.mxu0 0.0
      %1647 = vmatprep.subr.mxu0 0.0
      %1648 = vmatpush1.msra.mxu0 0.0
      %1649 = vmatprep.subr.mxu0 0.0
      %1650 = vmatpush1.msra.mxu0 0.0
      %1651 = vmatprep.subr.mxu0 0.0
      %1652 = vmatpush1.msra.mxu0 0.0
      %1653 = vmatprep.subr.mxu0 0.0
      %1654 = vmatpush1.msra.mxu0 0.0
      %1655 = vmatprep.subr.mxu0 0.0
      %1656 = vmatpush1.msra.mxu0 0.0
      %1657 = vmatprep.subr.mxu0 0.0
      %1658 = vmatpush1.msra.mxu0 0.0
      %1659 = vmatprep.subr.mxu0 0.0
      %1660 = vmatpush1.msra.mxu0 0.0
      %1661 = vmatprep.subr.mxu0 0.0
      %1662 = vmatpush1.msra.mxu0 0.0
      %1663 = vmatprep.subr.mxu0 0.0
      %1664 = vmatpush1.msra.mxu0 0.0
      %1665 = vmatprep.subr.mxu0 0.0
      %1666 = vmatpush1.msra.mxu0 0.0
      %1667 = vmatprep.subr.mxu0 0.0
      %1668 = vmatpush1.msra.mxu0 0.0
      %1669 = vmatprep.subr.mxu0 0.0
      %1670 = vmatpush1.msra.mxu0 0.0
      %1671 = vmatprep.subr.mxu0 0.0
      %1672 = vmatpush1.msra.mxu0 0.0
      %1673 = vmatprep.subr.mxu0 0.0
      %1674 = vmatpush1.msra.mxu0 0.0
      %1675 = vmatprep.subr.mxu0 0.0
      %1676 = vmatpush1.msra.mxu0 0.0
      %1677 = vmatprep.mubr.f32.mxu0 0.0
      %1678 = vmatmul.mubr.f32.gmra.mrb[0].mxu0 %v1590
      %v1679 = vpop.f32.mrb[0].mxu0
      %v1680 = vadd.f32 0.0, %v1679
      %v1681 = vpop.f32.mrb[0].mxu0
      %1682 = vmatprep.mubr.f32.mxu0 0.0
      %1683 = vmatmul.mubr.f32.gmra.mrb[0].mxu0 %v1593
      %v1684 = vpop.f32.mrb[0].mxu0
      %v1685 = vadd.f32 0.0, %v1684
      %v1686 = vpop.f32.mrb[0].mxu0
      %1687 = vmatprep.mubr.f32.mxu0 0.0
      %1688 = vmatmul.mubr.f32.gmra.mrb[0].mxu0 %v1596
      %v1689 = vpop.f32.mrb[0].mxu0
      %v1690 = vadd.f32 0.0, %v1689
      %v1691 = vpop.f32.mrb[0].mxu0
      %1692 = vmatprep.mubr.f32.mxu0 0.0
      %1693 = vmatmul.mubr.f32.gmra.mrb[0].mxu0 %v1599
      %v1694 = vpop.f32.mrb[0].mxu0
      %v1695 = vadd.f32 0.0, %v1694
      %v1696 = vpop.f32.mrb[0].mxu0
      %1697 = vmatprep.mubr.f32.mxu0 0.0
      %1698 = vmatmul.mubr.f32.gmra.mrb[0].mxu0 %v1602
      %v1699 = vpop.f32.mrb[0].mxu0
      %v1700 = vadd.f32 0.0, %v1699
      %v1701 = vpop.f32.mrb[0].mxu0
      %1702 = vmatprep.mubr.f32.mxu0 0.0
      %1703 = vmatmul.mubr.f32.gmra.mrb[0].mxu0 %v1605
      %v1704 = vpop.f32.mrb[0].mxu0
      %v1705 = vadd.f32 0.0, %v1704
      %v1706 = vpop.f32.mrb[0].mxu0
      %1707 = vmatprep.mubr.f32.mxu0 0.0
      %1708 = vmatmul.mubr.f32.gmra.mrb[0].mxu0 %v1608
      %v1709 = vpop.f32.mrb[0].mxu0
      %v1710 = vadd.f32 0.0, %v1709
      %v1711 = vpop.f32.mrb[0].mxu0
      %1712 = vmatprep.mubr.f32.mxu0 0.0
      %1713 = vmatmul.mubr.f32.gmra.mrb[0].mxu0 %v1611
      %v1714 = vpop.f32.mrb[0].mxu0
      %v1715 = vadd.f32 0.0, %v1714
      %v1716 = vpop.f32.mrb[0].mxu0
      %1717 = vdwg.mxu0
      %v1719 = vsel %vm781, %v1131, 0
      %v1722 = vsel %vm781, %v1136, 0
      %v1725 = vsel %vm781, %v1141, 0
      %v1728 = vsel %vm781, %v1146, 0
      %v1731 = vsel %vm781, %v1151, 0
      %v1734 = vsel %vm781, %v1156, 0
      %v1737 = vsel %vm781, %v1161, 0
      %v1740 = vsel %vm781, %v1166, 0
      %1742 = vmatprep.subr.mxu0 0.0
      %1743 = vmatpush1.msra.mxu0 %v1169
      %1744 = vmatprep.subr.mxu0 0.0
      %1745 = vmatpush1.msra.mxu0 0.0
      %1746 = vmatprep.subr.mxu0 0.0
      %1747 = vmatpush1.msra.mxu0 0.0
      %1748 = vmatprep.subr.mxu0 0.0
      %1749 = vmatpush1.msra.mxu0 0.0
      %1750 = vmatprep.subr.mxu0 0.0
      %1751 = vmatpush1.msra.mxu0 0.0
      %1752 = vmatprep.subr.mxu0 0.0
      %1753 = vmatpush1.msra.mxu0 0.0
      %1754 = vmatprep.subr.mxu0 0.0
      %1755 = vmatpush1.msra.mxu0 0.0
      %1756 = vmatprep.subr.mxu0 0.0
      %1757 = vmatpush1.msra.mxu0 0.0
      %1758 = vmatprep.subr.mxu0 0.0
      %1759 = vmatpush1.msra.mxu0 0.0
      %1760 = vmatprep.subr.mxu0 0.0
      %1761 = vmatpush1.msra.mxu0 0.0
      %1762 = vmatprep.subr.mxu0 0.0
      %1763 = vmatpush1.msra.mxu0 0.0
      %1764 = vmatprep.subr.mxu0 0.0
      %1765 = vmatpush1.msra.mxu0 0.0
      %1766 = vmatprep.subr.mxu0 0.0
      %1767 = vmatpush1.msra.mxu0 0.0
      %1768 = vmatprep.subr.mxu0 0.0
      %1769 = vmatpush1.msra.mxu0 0.0
      %1770 = vmatprep.subr.mxu0 0.0
      %1771 = vmatpush1.msra.mxu0 0.0
      %1772 = vmatprep.subr.mxu0 0.0
      %1773 = vmatpush1.msra.mxu0 0.0
      %1774 = vmatprep.subr.mxu0 0.0
      %1775 = vmatpush1.msra.mxu0 0.0
      %1776 = vmatprep.subr.mxu0 0.0
      %1777 = vmatpush1.msra.mxu0 0.0
      %1778 = vmatprep.subr.mxu0 0.0
      %1779 = vmatpush1.msra.mxu0 0.0
      %1780 = vmatprep.subr.mxu0 0.0
      %1781 = vmatpush1.msra.mxu0 0.0
      %1782 = vmatprep.subr.mxu0 0.0
      %1783 = vmatpush1.msra.mxu0 0.0
      %1784 = vmatprep.subr.mxu0 0.0
      %1785 = vmatpush1.msra.mxu0 0.0
      %1786 = vmatprep.subr.mxu0 0.0
      %1787 = vmatpush1.msra.mxu0 0.0
      %1788 = vmatprep.subr.mxu0 0.0
      %1789 = vmatpush1.msra.mxu0 0.0
      %1790 = vmatprep.subr.mxu0 0.0
      %1791 = vmatpush1.msra.mxu0 0.0
      %1792 = vmatprep.subr.mxu0 0.0
      %1793 = vmatpush1.msra.mxu0 0.0
      %1794 = vmatprep.subr.mxu0 0.0
      %1795 = vmatpush1.msra.mxu0 0.0
      %1796 = vmatprep.subr.mxu0 0.0
      %1797 = vmatpush1.msra.mxu0 0.0
      %1798 = vmatprep.subr.mxu0 0.0
      %1799 = vmatpush1.msra.mxu0 0.0
      %1800 = vmatprep.subr.mxu0 0.0
      %1801 = vmatpush1.msra.mxu0 0.0
      %1802 = vmatprep.subr.mxu0 0.0
      %1803 = vmatpush1.msra.mxu0 0.0
      %1804 = vmatprep.subr.mxu0 0.0
      %1805 = vmatpush1.msra.mxu0 0.0
      %1806 = vmatprep.mubr.f32.mxu0 0.0
      %1807 = vmatmul.mubr.f32.gmra.mrb[0].mxu0 %v1719
      %v1808 = vpop.f32.mrb[0].mxu0
      %v1809 = vadd.f32 %v1680, %v1808
      %v1810 = vpop.f32.mrb[0].mxu0
      %1811 = vmatprep.mubr.f32.mxu0 0.0
      %1812 = vmatmul.mubr.f32.gmra.mrb[0].mxu0 %v1722
      %v1813 = vpop.f32.mrb[0].mxu0
      %v1814 = vadd.f32 %v1685, %v1813
      %v1815 = vpop.f32.mrb[0].mxu0
      %1816 = vmatprep.mubr.f32.mxu0 0.0
      %1817 = vmatmul.mubr.f32.gmra.mrb[0].mxu0 %v1725
      %v1818 = vpop.f32.mrb[0].mxu0
      %v1819 = vadd.f32 %v1690, %v1818
      %v1820 = vpop.f32.mrb[0].mxu0
      %1821 = vmatprep.mubr.f32.mxu0 0.0
      %1822 = vmatmul.mubr.f32.gmra.mrb[0].mxu0 %v1728
      %v1823 = vpop.f32.mrb[0].mxu0
      %v1824 = vadd.f32 %v1695, %v1823
      %v1825 = vpop.f32.mrb[0].mxu0
      %1826 = vmatprep.mubr.f32.mxu0 0.0
      %1827 = vmatmul.mubr.f32.gmra.mrb[0].mxu0 %v1731
      %v1828 = vpop.f32.mrb[0].mxu0
      %v1829 = vadd.f32 %v1700, %v1828
      %v1830 = vpop.f32.mrb[0].mxu0
      %1831 = vmatprep.mubr.f32.mxu0 0.0
      %1832 = vmatmul.mubr.f32.gmra.mrb[0].mxu0 %v1734
      %v1833 = vpop.f32.mrb[0].mxu0
      %v1834 = vadd.f32 %v1705, %v1833
      %v1835 = vpop.f32.mrb[0].mxu0
      %1836 = vmatprep.mubr.f32.mxu0 0.0
      %1837 = vmatmul.mubr.f32.gmra.mrb[0].mxu0 %v1737
      %v1838 = vpop.f32.mrb[0].mxu0
      %v1839 = vadd.f32 %v1710, %v1838
      %v1840 = vpop.f32.mrb[0].mxu0
      %1841 = vmatprep.mubr.f32.mxu0 0.0
      %1842 = vmatmul.mubr.f32.gmra.mrb[0].mxu0 %v1740
      %v1843 = vpop.f32.mrb[0].mxu0
      %v1844 = vadd.f32 %v1715, %v1843
      %v1845 = vpop.f32.mrb[0].mxu0
      %1846 = vdwg.mxu0
      %1847 = vrot.lane.b32.xlu0 %v749, 112
      %v1848 = vpop.permute.xlu0 %1847
      %1849 = vrot.lane.b32.xlu0 %v750, 112
      %v1850 = vpop.permute.xlu0 %1849
      %1851 = vrot.lane.b32.xlu0 %v751, 112
      %v1852 = vpop.permute.xlu0 %1851
      %1853 = vrot.lane.b32.xlu0 %v752, 112
      %v1854 = vpop.permute.xlu0 %1853
      %1855 = vrot.lane.b32.xlu0 %v753, 112
      %v1856 = vpop.permute.xlu0 %1855
      %1857 = vrot.lane.b32.xlu0 %v754, 112
      %v1858 = vpop.permute.xlu0 %1857
      %1859 = vrot.lane.b32.xlu0 %v755, 112
      %v1860 = vpop.permute.xlu0 %1859
      %1861 = vrot.lane.b32.xlu0 %v756, 112
      %v1862 = vpop.permute.xlu0 %1861
      %1863 = vrot.lane.b32.xlu0 %v749, 80
      %v1864 = vpop.permute.xlu0 %1863
      %1865 = vrot.lane.b32.xlu0 %v750, 80
      %v1866 = vpop.permute.xlu0 %1865
      %1867 = vrot.lane.b32.xlu0 %v751, 80
      %v1868 = vpop.permute.xlu0 %1867
      %1869 = vrot.lane.b32.xlu0 %v752, 80
      %v1870 = vpop.permute.xlu0 %1869
      %1871 = vrot.lane.b32.xlu0 %v753, 80
      %v1872 = vpop.permute.xlu0 %1871
      %1873 = vrot.lane.b32.xlu0 %v754, 80
      %v1874 = vpop.permute.xlu0 %1873
      %1875 = vrot.lane.b32.xlu0 %v755, 80
      %v1876 = vpop.permute.xlu0 %1875
      %1877 = vrot.lane.b32.xlu0 %v756, 80
      %v1878 = vpop.permute.xlu0 %1877
      %v1879 = vsel %vm781, %v1848, 0
      %v1881 = vsel %vm781, %v1850, 0
      %v1883 = vsel %vm781, %v1852, 0
      %v1885 = vsel %vm781, %v1854, 0
      %v1887 = vsel %vm781, %v1856, 0
      %v1889 = vsel %vm781, %v1858, 0
      %v1891 = vsel %vm781, %v1860, 0
      %v1893 = vsel %vm781, %v1862, 0
      %v1895 = vsel %vm781, %v1864, 0
      %v1897 = vsel %vm781, %v1866, 0
      %v1899 = vsel %vm781, %v1868, 0
      %v1901 = vsel %vm781, %v1870, 0
      %v1903 = vsel %vm781, %v1872, 0
      %v1905 = vsel %vm781, %v1874, 0
      %v1907 = vsel %vm781, %v1876, 0
      %v1909 = vsel %vm781, %v1878, 0
      %1911 = vmatprep.subr.mxu0 0.0
      %1912 = vmatpush1.xpose.msra.mxu0 %v1895
      %1913 = vmatprep.subr.mxu0 0.0
      %1914 = vmatpush1.xpose.msra.mxu0 %v1897
      %1915 = vmatprep.subr.mxu0 0.0
      %1916 = vmatpush1.xpose.msra.mxu0 %v1899
      %1917 = vmatprep.subr.mxu0 0.0
      %1918 = vmatpush1.xpose.msra.mxu0 %v1901
      %1919 = vmatprep.subr.mxu0 0.0
      %1920 = vmatpush1.xpose.msra.mxu0 %v1903
      %1921 = vmatprep.subr.mxu0 0.0
      %1922 = vmatpush1.xpose.msra.mxu0 %v1905
      %1923 = vmatprep.subr.mxu0 0.0
      %1924 = vmatpush1.xpose.msra.mxu0 %v1907
      %1925 = vmatprep.subr.mxu0 0.0
      %1926 = vmatpush1.xpose.msra.mxu0 %v1909
      %1927 = vmatprep.subr.mxu0 0.0
      %1928 = vmatpush1.xpose.msra.mxu0 0.0
      %1929 = vmatprep.subr.mxu0 0.0
      %1930 = vmatpush1.xpose.msra.mxu0 0.0
      %1931 = vmatprep.subr.mxu0 0.0
      %1932 = vmatpush1.xpose.msra.mxu0 0.0
      %1933 = vmatprep.subr.mxu0 0.0
      %1934 = vmatpush1.xpose.msra.mxu0 0.0
      %1935 = vmatprep.subr.mxu0 0.0
      %1936 = vmatpush1.xpose.msra.mxu0 0.0
      %1937 = vmatprep.subr.mxu0 0.0
      %1938 = vmatpush1.xpose.msra.mxu0 0.0
      %1939 = vmatprep.subr.mxu0 0.0
      %1940 = vmatpush1.xpose.msra.mxu0 0.0
      %1941 = vmatprep.subr.mxu0 0.0
      %1942 = vmatpush1.xpose.msra.mxu0 0.0
      %1943 = vmatprep.subr.mxu0 0.0
      %1944 = vmatpush1.xpose.msra.mxu0 0.0
      %1945 = vmatprep.subr.mxu0 0.0
      %1946 = vmatpush1.xpose.msra.mxu0 0.0
      %1947 = vmatprep.subr.mxu0 0.0
      %1948 = vmatpush1.xpose.msra.mxu0 0.0
      %1949 = vmatprep.subr.mxu0 0.0
      %1950 = vmatpush1.xpose.msra.mxu0 0.0
      %1951 = vmatprep.subr.mxu0 0.0
      %1952 = vmatpush1.xpose.msra.mxu0 0.0
      %1953 = vmatprep.subr.mxu0 0.0
      %1954 = vmatpush1.xpose.msra.mxu0 0.0
      %1955 = vmatprep.subr.mxu0 0.0
      %1956 = vmatpush1.xpose.msra.mxu0 0.0
      %1957 = vmatprep.subr.mxu0 0.0
      %1958 = vmatpush1.xpose.msra.mxu0 0.0
      %1959 = vmatprep.subr.mxu0 0.0
      %1960 = vmatpush1.xpose.msra.mxu0 0.0
      %1961 = vmatprep.subr.mxu0 0.0
      %1962 = vmatpush1.xpose.msra.mxu0 0.0
      %1963 = vmatprep.subr.mxu0 0.0
      %1964 = vmatpush1.xpose.msra.mxu0 0.0
      %1965 = vmatprep.subr.mxu0 0.0
      %1966 = vmatpush1.xpose.msra.mxu0 0.0
      %1967 = vmatprep.subr.mxu0 0.0
      %1968 = vmatpush1.xpose.msra.mxu0 0.0
      %1969 = vmatprep.subr.mxu0 0.0
      %1970 = vmatpush1.xpose.msra.mxu0 0.0
      %1971 = vmatprep.subr.mxu0 0.0
      %1972 = vmatpush1.xpose.msra.mxu0 0.0
      %1973 = vmatprep.subr.mxu0 0.0
      %1974 = vmatpush1.xpose.msra.mxu0 0.0
      %1975 = vmatprep.mubr.f32.mxu0 0.0
      %1976 = vmatmul.mubr.f32.gmra.mrb[0].mxu0 %v1879
      %v1977 = vpop.f32.mrb[0].mxu0
      %v1978 = vadd.f32 0.0, %v1977
      %v1979 = vpop.f32.mrb[0].mxu0
      %1980 = vmatprep.mubr.f32.mxu0 0.0
      %1981 = vmatmul.mubr.f32.gmra.mrb[0].mxu0 %v1881
      %v1982 = vpop.f32.mrb[0].mxu0
      %v1983 = vadd.f32 0.0, %v1982
      %v1984 = vpop.f32.mrb[0].mxu0
      %1985 = vmatprep.mubr.f32.mxu0 0.0
      %1986 = vmatmul.mubr.f32.gmra.mrb[0].mxu0 %v1883
      %v1987 = vpop.f32.mrb[0].mxu0
      %v1988 = vadd.f32 0.0, %v1987
      %v1989 = vpop.f32.mrb[0].mxu0
      %1990 = vmatprep.mubr.f32.mxu0 0.0
      %1991 = vmatmul.mubr.f32.gmra.mrb[0].mxu0 %v1885
      %v1992 = vpop.f32.mrb[0].mxu0
      %v1993 = vadd.f32 0.0, %v1992
      %v1994 = vpop.f32.mrb[0].mxu0
      %1995 = vmatprep.mubr.f32.mxu0 0.0
      %1996 = vmatmul.mubr.f32.gmra.mrb[0].mxu0 %v1887
      %v1997 = vpop.f32.mrb[0].mxu0
      %v1998 = vadd.f32 0.0, %v1997
      %v1999 = vpop.f32.mrb[0].mxu0
      %2000 = vmatprep.mubr.f32.mxu0 0.0
      %2001 = vmatmul.mubr.f32.gmra.mrb[0].mxu0 %v1889
      %v2002 = vpop.f32.mrb[0].mxu0
      %v2003 = vadd.f32 0.0, %v2002
      %v2004 = vpop.f32.mrb[0].mxu0
      %2005 = vmatprep.mubr.f32.mxu0 0.0
      %2006 = vmatmul.mubr.f32.gmra.mrb[0].mxu0 %v1891
      %v2007 = vpop.f32.mrb[0].mxu0
      %v2008 = vadd.f32 0.0, %v2007
      %v2009 = vpop.f32.mrb[0].mxu0
      %2010 = vmatprep.mubr.f32.mxu0 0.0
      %2011 = vmatmul.mubr.f32.gmra.mrb[0].mxu0 %v1893
      %v2012 = vpop.f32.mrb[0].mxu0
      %v2013 = vadd.f32 0.0, %v2012
      %v2014 = vpop.f32.mrb[0].mxu0
      %2015 = vdwg.mxu0
      %v2016 = vmul.f32 %v1978, 0.35355338
      %v2017 = vmul.f32 %v1983, 0.35355338
      %v2018 = vmul.f32 %v1988, 0.35355338
      %v2019 = vmul.f32 %v1993, 0.35355338
      %v2020 = vmul.f32 %v1998, 0.35355338
      %v2021 = vmul.f32 %v2003, 0.35355338
      %v2022 = vmul.f32 %v2008, 0.35355338
      %v2023 = vmul.f32 %v2013, 0.35355338
      %v2024 = vsel %vm927, %v2016, -inf
      %2025 = vmax.xlane.f32.xlu0 %v2024
      %v2026 = vpop.xlane.xlu0 %2025
      %v2027 = vsel %vm927, %v2017, -inf
      %2028 = vmax.xlane.f32.xlu0 %v2027
      %v2029 = vpop.xlane.xlu0 %2028
      %v2030 = vsel %vm927, %v2018, -inf
      %2031 = vmax.xlane.f32.xlu0 %v2030
      %v2032 = vpop.xlane.xlu0 %2031
      %v2033 = vsel %vm927, %v2019, -inf
      %2034 = vmax.xlane.f32.xlu0 %v2033
      %v2035 = vpop.xlane.xlu0 %2034
      %v2036 = vsel %vm927, %v2020, -inf
      %2037 = vmax.xlane.f32.xlu0 %v2036
      %v2038 = vpop.xlane.xlu0 %2037
      %v2039 = vsel %vm927, %v2021, -inf
      %2040 = vmax.xlane.f32.xlu0 %v2039
      %v2041 = vpop.xlane.xlu0 %2040
      %v2042 = vsel %vm927, %v2022, -inf
      %2043 = vmax.xlane.f32.xlu0 %v2042
      %v2044 = vpop.xlane.xlu0 %2043
      %v2045 = vsel %vm927, %v2023, -inf
      %2046 = vmax.xlane.f32.xlu0 %v2045
      %v2047 = vpop.xlane.xlu0 %2046
      %v2048 = vsub.f32 %v2016, %v2026
      %v2049 = vsub.f32 %v2017, %v2029
      %v2050 = vsub.f32 %v2018, %v2032
      %v2051 = vsub.f32 %v2019, %v2035
      %v2052 = vsub.f32 %v2020, %v2038
      %v2053 = vsub.f32 %v2021, %v2041
      %v2054 = vsub.f32 %v2022, %v2044
      %v2055 = vsub.f32 %v2023, %v2047
      %v2056 = vmul.f32 %v2048, 1.442695
      %v2057 = vpow.pop %v2056
      %v2058 = vmul.f32 %v2049, 1.442695
      %v2059 = vpow.pop %v2058
      %v2060 = vmul.f32 %v2050, 1.442695
      %v2061 = vpow.pop %v2060
      %v2062 = vmul.f32 %v2051, 1.442695
      %v2063 = vpow.pop %v2062
      %v2064 = vmul.f32 %v2052, 1.442695
      %v2065 = vpow.pop %v2064
      %v2066 = vmul.f32 %v2053, 1.442695
      %v2067 = vpow.pop %v2066
      %v2068 = vmul.f32 %v2054, 1.442695
      %v2069 = vpow.pop %v2068
      %v2070 = vmul.f32 %v2055, 1.442695
      %v2071 = vpow.pop %v2070
      %v2072 = vsel %vm927, %v2057, 0.0
      %2073 = vadd.xlane.f32.xlu0 %v2072
      %v2074 = vpop.xlane.xlu0 %2073
      %v2075 = vsel %vm927, %v2059, 0.0
      %2076 = vadd.xlane.f32.xlu0 %v2075
      %v2077 = vpop.xlane.xlu0 %2076
      %v2078 = vsel %vm927, %v2061, 0.0
      %2079 = vadd.xlane.f32.xlu0 %v2078
      %v2080 = vpop.xlane.xlu0 %2079
      %v2081 = vsel %vm927, %v2063, 0.0
      %2082 = vadd.xlane.f32.xlu0 %v2081
      %v2083 = vpop.xlane.xlu0 %2082
      %v2084 = vsel %vm927, %v2065, 0.0
      %2085 = vadd.xlane.f32.xlu0 %v2084
      %v2086 = vpop.xlane.xlu0 %2085
      %v2087 = vsel %vm927, %v2067, 0.0
      %2088 = vadd.xlane.f32.xlu0 %v2087
      %v2089 = vpop.xlane.xlu0 %2088
      %v2090 = vsel %vm927, %v2069, 0.0
      %2091 = vadd.xlane.f32.xlu0 %v2090
      %v2092 = vpop.xlane.xlu0 %2091
      %v2093 = vsel %vm927, %v2071, 0.0
      %2094 = vadd.xlane.f32.xlu0 %v2093
      %v2095 = vpop.xlane.xlu0 %2094
      %v2096 = vrcp.pop %v2074
      %v2097 = vmul.f32 %v2057, %v2096
      %v2098 = vrcp.pop %v2077
      %v2099 = vmul.f32 %v2059, %v2098
      %v2100 = vrcp.pop %v2080
      %v2101 = vmul.f32 %v2061, %v2100
      %v2102 = vrcp.pop %v2083
      %v2103 = vmul.f32 %v2063, %v2102
      %v2104 = vrcp.pop %v2086
      %v2105 = vmul.f32 %v2065, %v2104
      %v2106 = vrcp.pop %v2089
      %v2107 = vmul.f32 %v2067, %v2106
      %v2108 = vrcp.pop %v2092
      %v2109 = vmul.f32 %v2069, %v2108
      %v2110 = vrcp.pop %v2095
      %v2111 = vmul.f32 %v2071, %v2110
      %2112 = vrot.lane.b32.xlu0 %v749, 48
      %v2113 = vpop.permute.xlu0 %2112
      %2114 = vrot.lane.b32.xlu0 %v750, 48
      %v2115 = vpop.permute.xlu0 %2114
      %2116 = vrot.lane.b32.xlu0 %v751, 48
      %v2117 = vpop.permute.xlu0 %2116
      %2118 = vrot.lane.b32.xlu0 %v752, 48
      %v2119 = vpop.permute.xlu0 %2118
      %2120 = vrot.lane.b32.xlu0 %v753, 48
      %v2121 = vpop.permute.xlu0 %2120
      %2122 = vrot.lane.b32.xlu0 %v754, 48
      %v2123 = vpop.permute.xlu0 %2122
      %2124 = vrot.lane.b32.xlu0 %v755, 48
      %v2125 = vpop.permute.xlu0 %2124
      %2126 = vrot.lane.b32.xlu0 %v756, 48
      %v2127 = vpop.permute.xlu0 %2126
      %v2137 = vsel %vm927, %v2097, 0
      %v2140 = vsel %vm927, %v2099, 0
      %v2143 = vsel %vm927, %v2101, 0
      %v2146 = vsel %vm927, %v2103, 0
      %v2149 = vsel %vm927, %v2105, 0
      %v2152 = vsel %vm927, %v2107, 0
      %v2155 = vsel %vm927, %v2109, 0
      %v2158 = vsel %vm927, %v2111, 0
      %2160 = vmatprep.subr.mxu0 0.0
      %2161 = vmatpush1.msra.mxu0 %v2113
      %2162 = vmatprep.subr.mxu0 0.0
      %2163 = vmatpush1.msra.mxu0 %v2115
      %2164 = vmatprep.subr.mxu0 0.0
      %2165 = vmatpush1.msra.mxu0 %v2117
      %2166 = vmatprep.subr.mxu0 0.0
      %2167 = vmatpush1.msra.mxu0 %v2119
      %2168 = vmatprep.subr.mxu0 0.0
      %2169 = vmatpush1.msra.mxu0 %v2121
      %2170 = vmatprep.subr.mxu0 0.0
      %2171 = vmatpush1.msra.mxu0 %v2123
      %2172 = vmatprep.subr.mxu0 0.0
      %2173 = vmatpush1.msra.mxu0 %v2125
      %2174 = vmatprep.subr.mxu0 0.0
      %2175 = vmatpush1.msra.mxu0 %v2127
      %2176 = vmatprep.subr.mxu0 0.0
      %2177 = vmatpush1.msra.mxu0 0.0
      %2178 = vmatprep.subr.mxu0 0.0
      %2179 = vmatpush1.msra.mxu0 0.0
      %2180 = vmatprep.subr.mxu0 0.0
      %2181 = vmatpush1.msra.mxu0 0.0
      %2182 = vmatprep.subr.mxu0 0.0
      %2183 = vmatpush1.msra.mxu0 0.0
      %2184 = vmatprep.subr.mxu0 0.0
      %2185 = vmatpush1.msra.mxu0 0.0
      %2186 = vmatprep.subr.mxu0 0.0
      %2187 = vmatpush1.msra.mxu0 0.0
      %2188 = vmatprep.subr.mxu0 0.0
      %2189 = vmatpush1.msra.mxu0 0.0
      %2190 = vmatprep.subr.mxu0 0.0
      %2191 = vmatpush1.msra.mxu0 0.0
      %2192 = vmatprep.subr.mxu0 0.0
      %2193 = vmatpush1.msra.mxu0 0.0
      %2194 = vmatprep.subr.mxu0 0.0
      %2195 = vmatpush1.msra.mxu0 0.0
      %2196 = vmatprep.subr.mxu0 0.0
      %2197 = vmatpush1.msra.mxu0 0.0
      %2198 = vmatprep.subr.mxu0 0.0
      %2199 = vmatpush1.msra.mxu0 0.0
      %2200 = vmatprep.subr.mxu0 0.0
      %2201 = vmatpush1.msra.mxu0 0.0
      %2202 = vmatprep.subr.mxu0 0.0
      %2203 = vmatpush1.msra.mxu0 0.0
      %2204 = vmatprep.subr.mxu0 0.0
      %2205 = vmatpush1.msra.mxu0 0.0
      %2206 = vmatprep.subr.mxu0 0.0
      %2207 = vmatpush1.msra.mxu0 0.0
      %2208 = vmatprep.subr.mxu0 0.0
      %2209 = vmatpush1.msra.mxu0 0.0
      %2210 = vmatprep.subr.mxu0 0.0
      %2211 = vmatpush1.msra.mxu0 0.0
      %2212 = vmatprep.subr.mxu0 0.0
      %2213 = vmatpush1.msra.mxu0 0.0
      %2214 = vmatprep.subr.mxu0 0.0
      %2215 = vmatpush1.msra.mxu0 0.0
      %2216 = vmatprep.subr.mxu0 0.0
      %2217 = vmatpush1.msra.mxu0 0.0
      %2218 = vmatprep.subr.mxu0 0.0
      %2219 = vmatpush1.msra.mxu0 0.0
      %2220 = vmatprep.subr.mxu0 0.0
      %2221 = vmatpush1.msra.mxu0 0.0
      %2222 = vmatprep.subr.mxu0 0.0
      %2223 = vmatpush1.msra.mxu0 0.0
      %2224 = vmatprep.mubr.f32.mxu0 0.0
      %2225 = vmatmul.mubr.f32.gmra.mrb[0].mxu0 %v2137
      %v2226 = vpop.f32.mrb[0].mxu0
      %v2227 = vadd.f32 0.0, %v2226
      %v2228 = vpop.f32.mrb[0].mxu0
      %2229 = vmatprep.mubr.f32.mxu0 0.0
      %2230 = vmatmul.mubr.f32.gmra.mrb[0].mxu0 %v2140
      %v2231 = vpop.f32.mrb[0].mxu0
      %v2232 = vadd.f32 0.0, %v2231
      %v2233 = vpop.f32.mrb[0].mxu0
      %2234 = vmatprep.mubr.f32.mxu0 0.0
      %2235 = vmatmul.mubr.f32.gmra.mrb[0].mxu0 %v2143
      %v2236 = vpop.f32.mrb[0].mxu0
      %v2237 = vadd.f32 0.0, %v2236
      %v2238 = vpop.f32.mrb[0].mxu0
      %2239 = vmatprep.mubr.f32.mxu0 0.0
      %2240 = vmatmul.mubr.f32.gmra.mrb[0].mxu0 %v2146
      %v2241 = vpop.f32.mrb[0].mxu0
      %v2242 = vadd.f32 0.0, %v2241
      %v2243 = vpop.f32.mrb[0].mxu0
      %2244 = vmatprep.mubr.f32.mxu0 0.0
      %2245 = vmatmul.mubr.f32.gmra.mrb[0].mxu0 %v2149
      %v2246 = vpop.f32.mrb[0].mxu0
      %v2247 = vadd.f32 0.0, %v2246
      %v2248 = vpop.f32.mrb[0].mxu0
      %2249 = vmatprep.mubr.f32.mxu0 0.0
      %2250 = vmatmul.mubr.f32.gmra.mrb[0].mxu0 %v2152
      %v2251 = vpop.f32.mrb[0].mxu0
      %v2252 = vadd.f32 0.0, %v2251
      %v2253 = vpop.f32.mrb[0].mxu0
      %2254 = vmatprep.mubr.f32.mxu0 0.0
      %2255 = vmatmul.mubr.f32.gmra.mrb[0].mxu0 %v2155
      %v2256 = vpop.f32.mrb[0].mxu0
      %v2257 = vadd.f32 0.0, %v2256
      %v2258 = vpop.f32.mrb[0].mxu0
      %2259 = vmatprep.mubr.f32.mxu0 0.0
      %2260 = vmatmul.mubr.f32.gmra.mrb[0].mxu0 %v2158
      %v2261 = vpop.f32.mrb[0].mxu0
      %v2262 = vadd.f32 0.0, %v2261
      %v2263 = vpop.f32.mrb[0].mxu0
      %2264 = vdwg.mxu0
      %v2265 = vld [vmem:[%s6 + $0x10] sm:$0xff]
      %v2267 = vsel %vm781, %v2227, 0
      %v2270 = vsel %vm781, %v2232, 0
      %v2273 = vsel %vm781, %v2237, 0
      %v2276 = vsel %vm781, %v2242, 0
      %v2279 = vsel %vm781, %v2247, 0
      %v2282 = vsel %vm781, %v2252, 0
      %v2285 = vsel %vm781, %v2257, 0
      %v2288 = vsel %vm781, %v2262, 0
      %2290 = vmatprep.subr.mxu0 0.0
      %2291 = vmatpush1.msra.mxu0 %v2265
      %2292 = vmatprep.subr.mxu0 0.0
      %2293 = vmatpush1.msra.mxu0 0.0
      %2294 = vmatprep.subr.mxu0 0.0
      %2295 = vmatpush1.msra.mxu0 0.0
      %2296 = vmatprep.subr.mxu0 0.0
      %2297 = vmatpush1.msra.mxu0 0.0
      %2298 = vmatprep.subr.mxu0 0.0
      %2299 = vmatpush1.msra.mxu0 0.0
      %2300 = vmatprep.subr.mxu0 0.0
      %2301 = vmatpush1.msra.mxu0 0.0
      %2302 = vmatprep.subr.mxu0 0.0
      %2303 = vmatpush1.msra.mxu0 0.0
      %2304 = vmatprep.subr.mxu0 0.0
      %2305 = vmatpush1.msra.mxu0 0.0
      %2306 = vmatprep.subr.mxu0 0.0
      %2307 = vmatpush1.msra.mxu0 0.0
      %2308 = vmatprep.subr.mxu0 0.0
      %2309 = vmatpush1.msra.mxu0 0.0
      %2310 = vmatprep.subr.mxu0 0.0
      %2311 = vmatpush1.msra.mxu0 0.0
      %2312 = vmatprep.subr.mxu0 0.0
      %2313 = vmatpush1.msra.mxu0 0.0
      %2314 = vmatprep.subr.mxu0 0.0
      %2315 = vmatpush1.msra.mxu0 0.0
      %2316 = vmatprep.subr.mxu0 0.0
      %2317 = vmatpush1.msra.mxu0 0.0
      %2318 = vmatprep.subr.mxu0 0.0
      %2319 = vmatpush1.msra.mxu0 0.0
      %2320 = vmatprep.subr.mxu0 0.0
      %2321 = vmatpush1.msra.mxu0 0.0
      %2322 = vmatprep.subr.mxu0 0.0
      %2323 = vmatpush1.msra.mxu0 0.0
      %2324 = vmatprep.subr.mxu0 0.0
      %2325 = vmatpush1.msra.mxu0 0.0
      %2326 = vmatprep.subr.mxu0 0.0
      %2327 = vmatpush1.msra.mxu0 0.0
      %2328 = vmatprep.subr.mxu0 0.0
      %2329 = vmatpush1.msra.mxu0 0.0
      %2330 = vmatprep.subr.mxu0 0.0
      %2331 = vmatpush1.msra.mxu0 0.0
      %2332 = vmatprep.subr.mxu0 0.0
      %2333 = vmatpush1.msra.mxu0 0.0
      %2334 = vmatprep.subr.mxu0 0.0
      %2335 = vmatpush1.msra.mxu0 0.0
      %2336 = vmatprep.subr.mxu0 0.0
      %2337 = vmatpush1.msra.mxu0 0.0
      %2338 = vmatprep.subr.mxu0 0.0
      %2339 = vmatpush1.msra.mxu0 0.0
      %2340 = vmatprep.subr.mxu0 0.0
      %2341 = vmatpush1.msra.mxu0 0.0
      %2342 = vmatprep.subr.mxu0 0.0
      %2343 = vmatpush1.msra.mxu0 0.0
      %2344 = vmatprep.subr.mxu0 0.0
      %2345 = vmatpush1.msra.mxu0 0.0
      %2346 = vmatprep.subr.mxu0 0.0
      %2347 = vmatpush1.msra.mxu0 0.0
      %2348 = vmatprep.subr.mxu0 0.0
      %2349 = vmatpush1.msra.mxu0 0.0
      %2350 = vmatprep.subr.mxu0 0.0
      %2351 = vmatpush1.msra.mxu0 0.0
      %2352 = vmatprep.subr.mxu0 0.0
      %2353 = vmatpush1.msra.mxu0 0.0
      %2354 = vmatprep.mubr.f32.mxu0 0.0
      %2355 = vmatmul.mubr.f32.gmra.mrb[0].mxu0 %v2267
      %v2356 = vpop.f32.mrb[0].mxu0
      %v2357 = vadd.f32 0.0, %v2356
      %v2358 = vpop.f32.mrb[0].mxu0
      %2359 = vmatprep.mubr.f32.mxu0 0.0
      %2360 = vmatmul.mubr.f32.gmra.mrb[0].mxu0 %v2270
      %v2361 = vpop.f32.mrb[0].mxu0
      %v2362 = vadd.f32 0.0, %v2361
      %v2363 = vpop.f32.mrb[0].mxu0
      %2364 = vmatprep.mubr.f32.mxu0 0.0
      %2365 = vmatmul.mubr.f32.gmra.mrb[0].mxu0 %v2273
      %v2366 = vpop.f32.mrb[0].mxu0
      %v2367 = vadd.f32 0.0, %v2366
      %v2368 = vpop.f32.mrb[0].mxu0
      %2369 = vmatprep.mubr.f32.mxu0 0.0
      %2370 = vmatmul.mubr.f32.gmra.mrb[0].mxu0 %v2276
      %v2371 = vpop.f32.mrb[0].mxu0
      %v2372 = vadd.f32 0.0, %v2371
      %v2373 = vpop.f32.mrb[0].mxu0
      %2374 = vmatprep.mubr.f32.mxu0 0.0
      %2375 = vmatmul.mubr.f32.gmra.mrb[0].mxu0 %v2279
      %v2376 = vpop.f32.mrb[0].mxu0
      %v2377 = vadd.f32 0.0, %v2376
      %v2378 = vpop.f32.mrb[0].mxu0
      %2379 = vmatprep.mubr.f32.mxu0 0.0
      %2380 = vmatmul.mubr.f32.gmra.mrb[0].mxu0 %v2282
      %v2381 = vpop.f32.mrb[0].mxu0
      %v2382 = vadd.f32 0.0, %v2381
      %v2383 = vpop.f32.mrb[0].mxu0
      %2384 = vmatprep.mubr.f32.mxu0 0.0
      %2385 = vmatmul.mubr.f32.gmra.mrb[0].mxu0 %v2285
      %v2386 = vpop.f32.mrb[0].mxu0
      %v2387 = vadd.f32 0.0, %v2386
      %v2388 = vpop.f32.mrb[0].mxu0
      %2389 = vmatprep.mubr.f32.mxu0 0.0
      %2390 = vmatmul.mubr.f32.gmra.mrb[0].mxu0 %v2288
      %v2391 = vpop.f32.mrb[0].mxu0
      %v2392 = vadd.f32 0.0, %v2391
      %v2393 = vpop.f32.mrb[0].mxu0
      %2394 = vdwg.mxu0
      %v2395 = vadd.f32 %v1809, %v2357
      %v2396 = vadd.f32 %v1814, %v2362
      %v2397 = vadd.f32 %v1819, %v2367
      %v2398 = vadd.f32 %v1824, %v2372
      %v2399 = vadd.f32 %v1829, %v2377
      %v2400 = vadd.f32 %v1834, %v2382
      %v2401 = vadd.f32 %v1839, %v2387
      %v2402 = vadd.f32 %v1844, %v2392
      %2403 = vrot.lane.b32.xlu0 %v749, 104
      %v2404 = vpop.permute.xlu0 %2403
      %2405 = vrot.lane.b32.xlu0 %v750, 104
      %v2406 = vpop.permute.xlu0 %2405
      %2407 = vrot.lane.b32.xlu0 %v751, 104
      %v2408 = vpop.permute.xlu0 %2407
      %2409 = vrot.lane.b32.xlu0 %v752, 104
      %v2410 = vpop.permute.xlu0 %2409
      %2411 = vrot.lane.b32.xlu0 %v753, 104
      %v2412 = vpop.permute.xlu0 %2411
      %2413 = vrot.lane.b32.xlu0 %v754, 104
      %v2414 = vpop.permute.xlu0 %2413
      %2415 = vrot.lane.b32.xlu0 %v755, 104
      %v2416 = vpop.permute.xlu0 %2415
      %2417 = vrot.lane.b32.xlu0 %v756, 104
      %v2418 = vpop.permute.xlu0 %2417
      %2419 = vrot.lane.b32.xlu0 %v749, 72
      %v2420 = vpop.permute.xlu0 %2419
      %2421 = vrot.lane.b32.xlu0 %v750, 72
      %v2422 = vpop.permute.xlu0 %2421
      %2423 = vrot.lane.b32.xlu0 %v751, 72
      %v2424 = vpop.permute.xlu0 %2423
      %2425 = vrot.lane.b32.xlu0 %v752, 72
      %v2426 = vpop.permute.xlu0 %2425
      %2427 = vrot.lane.b32.xlu0 %v753, 72
      %v2428 = vpop.permute.xlu0 %2427
      %2429 = vrot.lane.b32.xlu0 %v754, 72
      %v2430 = vpop.permute.xlu0 %2429
      %2431 = vrot.lane.b32.xlu0 %v755, 72
      %v2432 = vpop.permute.xlu0 %2431
      %2433 = vrot.lane.b32.xlu0 %v756, 72
      %v2434 = vpop.permute.xlu0 %2433
      %v2435 = vsel %vm781, %v2404, 0
      %v2437 = vsel %vm781, %v2406, 0
      %v2439 = vsel %vm781, %v2408, 0
      %v2441 = vsel %vm781, %v2410, 0
      %v2443 = vsel %vm781, %v2412, 0
      %v2445 = vsel %vm781, %v2414, 0
      %v2447 = vsel %vm781, %v2416, 0
      %v2449 = vsel %vm781, %v2418, 0
      %v2451 = vsel %vm781, %v2420, 0
      %v2453 = vsel %vm781, %v2422, 0
      %v2455 = vsel %vm781, %v2424, 0
      %v2457 = vsel %vm781, %v2426, 0
      %v2459 = vsel %vm781, %v2428, 0
      %v2461 = vsel %vm781, %v2430, 0
      %v2463 = vsel %vm781, %v2432, 0
      %v2465 = vsel %vm781, %v2434, 0
      %2467 = vmatprep.subr.mxu0 0.0
      %2468 = vmatpush1.xpose.msra.mxu0 %v2451
      %2469 = vmatprep.subr.mxu0 0.0
      %2470 = vmatpush1.xpose.msra.mxu0 %v2453
      %2471 = vmatprep.subr.mxu0 0.0
      %2472 = vmatpush1.xpose.msra.mxu0 %v2455
      %2473 = vmatprep.subr.mxu0 0.0
      %2474 = vmatpush1.xpose.msra.mxu0 %v2457
      %2475 = vmatprep.subr.mxu0 0.0
      %2476 = vmatpush1.xpose.msra.mxu0 %v2459
      %2477 = vmatprep.subr.mxu0 0.0
      %2478 = vmatpush1.xpose.msra.mxu0 %v2461
      %2479 = vmatprep.subr.mxu0 0.0
      %2480 = vmatpush1.xpose.msra.mxu0 %v2463
      %2481 = vmatprep.subr.mxu0 0.0
      %2482 = vmatpush1.xpose.msra.mxu0 %v2465
      %2483 = vmatprep.subr.mxu0 0.0
      %2484 = vmatpush1.xpose.msra.mxu0 0.0
      %2485 = vmatprep.subr.mxu0 0.0
      %2486 = vmatpush1.xpose.msra.mxu0 0.0
      %2487 = vmatprep.subr.mxu0 0.0
      %2488 = vmatpush1.xpose.msra.mxu0 0.0
      %2489 = vmatprep.subr.mxu0 0.0
      %2490 = vmatpush1.xpose.msra.mxu0 0.0
      %2491 = vmatprep.subr.mxu0 0.0
      %2492 = vmatpush1.xpose.msra.mxu0 0.0
      %2493 = vmatprep.subr.mxu0 0.0
      %2494 = vmatpush1.xpose.msra.mxu0 0.0
      %2495 = vmatprep.subr.mxu0 0.0
      %2496 = vmatpush1.xpose.msra.mxu0 0.0
      %2497 = vmatprep.subr.mxu0 0.0
      %2498 = vmatpush1.xpose.msra.mxu0 0.0
      %2499 = vmatprep.subr.mxu0 0.0
      %2500 = vmatpush1.xpose.msra.mxu0 0.0
      %2501 = vmatprep.subr.mxu0 0.0
      %2502 = vmatpush1.xpose.msra.mxu0 0.0
      %2503 = vmatprep.subr.mxu0 0.0
      %2504 = vmatpush1.xpose.msra.mxu0 0.0
      %2505 = vmatprep.subr.mxu0 0.0
      %2506 = vmatpush1.xpose.msra.mxu0 0.0
      %2507 = vmatprep.subr.mxu0 0.0
      %2508 = vmatpush1.xpose.msra.mxu0 0.0
      %2509 = vmatprep.subr.mxu0 0.0
      %2510 = vmatpush1.xpose.msra.mxu0 0.0
      %2511 = vmatprep.subr.mxu0 0.0
      %2512 = vmatpush1.xpose.msra.mxu0 0.0
      %2513 = vmatprep.subr.mxu0 0.0
      %2514 = vmatpush1.xpose.msra.mxu0 0.0
      %2515 = vmatprep.subr.mxu0 0.0
      %2516 = vmatpush1.xpose.msra.mxu0 0.0
      %2517 = vmatprep.subr.mxu0 0.0
      %2518 = vmatpush1.xpose.msra.mxu0 0.0
      %2519 = vmatprep.subr.mxu0 0.0
      %2520 = vmatpush1.xpose.msra.mxu0 0.0
      %2521 = vmatprep.subr.mxu0 0.0
      %2522 = vmatpush1.xpose.msra.mxu0 0.0
      %2523 = vmatprep.subr.mxu0 0.0
      %2524 = vmatpush1.xpose.msra.mxu0 0.0
      %2525 = vmatprep.subr.mxu0 0.0
      %2526 = vmatpush1.xpose.msra.mxu0 0.0
      %2527 = vmatprep.subr.mxu0 0.0
      %2528 = vmatpush1.xpose.msra.mxu0 0.0
      %2529 = vmatprep.subr.mxu0 0.0
      %2530 = vmatpush1.xpose.msra.mxu0 0.0
      %2531 = vmatprep.mubr.f32.mxu0 0.0
      %2532 = vmatmul.mubr.f32.gmra.mrb[0].mxu0 %v2435
      %v2533 = vpop.f32.mrb[0].mxu0
      %v2534 = vadd.f32 0.0, %v2533
      %v2535 = vpop.f32.mrb[0].mxu0
      %2536 = vmatprep.mubr.f32.mxu0 0.0
      %2537 = vmatmul.mubr.f32.gmra.mrb[0].mxu0 %v2437
      %v2538 = vpop.f32.mrb[0].mxu0
      %v2539 = vadd.f32 0.0, %v2538
      %v2540 = vpop.f32.mrb[0].mxu0
      %2541 = vmatprep.mubr.f32.mxu0 0.0
      %2542 = vmatmul.mubr.f32.gmra.mrb[0].mxu0 %v2439
      %v2543 = vpop.f32.mrb[0].mxu0
      %v2544 = vadd.f32 0.0, %v2543
      %v2545 = vpop.f32.mrb[0].mxu0
      %2546 = vmatprep.mubr.f32.mxu0 0.0
      %2547 = vmatmul.mubr.f32.gmra.mrb[0].mxu0 %v2441
      %v2548 = vpop.f32.mrb[0].mxu0
      %v2549 = vadd.f32 0.0, %v2548
      %v2550 = vpop.f32.mrb[0].mxu0
      %2551 = vmatprep.mubr.f32.mxu0 0.0
      %2552 = vmatmul.mubr.f32.gmra.mrb[0].mxu0 %v2443
      %v2553 = vpop.f32.mrb[0].mxu0
      %v2554 = vadd.f32 0.0, %v2553
      %v2555 = vpop.f32.mrb[0].mxu0
      %2556 = vmatprep.mubr.f32.mxu0 0.0
      %2557 = vmatmul.mubr.f32.gmra.mrb[0].mxu0 %v2445
      %v2558 = vpop.f32.mrb[0].mxu0
      %v2559 = vadd.f32 0.0, %v2558
      %v2560 = vpop.f32.mrb[0].mxu0
      %2561 = vmatprep.mubr.f32.mxu0 0.0
      %2562 = vmatmul.mubr.f32.gmra.mrb[0].mxu0 %v2447
      %v2563 = vpop.f32.mrb[0].mxu0
      %v2564 = vadd.f32 0.0, %v2563
      %v2565 = vpop.f32.mrb[0].mxu0
      %2566 = vmatprep.mubr.f32.mxu0 0.0
      %2567 = vmatmul.mubr.f32.gmra.mrb[0].mxu0 %v2449
      %v2568 = vpop.f32.mrb[0].mxu0
      %v2569 = vadd.f32 0.0, %v2568
      %v2570 = vpop.f32.mrb[0].mxu0
      %2571 = vdwg.mxu0
      %v2572 = vmul.f32 %v2534, 0.35355338
      %v2573 = vmul.f32 %v2539, 0.35355338
      %v2574 = vmul.f32 %v2544, 0.35355338
      %v2575 = vmul.f32 %v2549, 0.35355338
      %v2576 = vmul.f32 %v2554, 0.35355338
      %v2577 = vmul.f32 %v2559, 0.35355338
      %v2578 = vmul.f32 %v2564, 0.35355338
      %v2579 = vmul.f32 %v2569, 0.35355338
      %v2580 = vsel %vm927, %v2572, -inf
      %2581 = vmax.xlane.f32.xlu0 %v2580
      %v2582 = vpop.xlane.xlu0 %2581
      %v2583 = vsel %vm927, %v2573, -inf
      %2584 = vmax.xlane.f32.xlu0 %v2583
      %v2585 = vpop.xlane.xlu0 %2584
      %v2586 = vsel %vm927, %v2574, -inf
      %2587 = vmax.xlane.f32.xlu0 %v2586
      %v2588 = vpop.xlane.xlu0 %2587
      %v2589 = vsel %vm927, %v2575, -inf
      %2590 = vmax.xlane.f32.xlu0 %v2589
      %v2591 = vpop.xlane.xlu0 %2590
      %v2592 = vsel %vm927, %v2576, -inf
      %2593 = vmax.xlane.f32.xlu0 %v2592
      %v2594 = vpop.xlane.xlu0 %2593
      %v2595 = vsel %vm927, %v2577, -inf
      %2596 = vmax.xlane.f32.xlu0 %v2595
      %v2597 = vpop.xlane.xlu0 %2596
      %v2598 = vsel %vm927, %v2578, -inf
      %2599 = vmax.xlane.f32.xlu0 %v2598
      %v2600 = vpop.xlane.xlu0 %2599
      %v2601 = vsel %vm927, %v2579, -inf
      %2602 = vmax.xlane.f32.xlu0 %v2601
      %v2603 = vpop.xlane.xlu0 %2602
      %v2604 = vsub.f32 %v2572, %v2582
      %v2605 = vsub.f32 %v2573, %v2585
      %v2606 = vsub.f32 %v2574, %v2588
      %v2607 = vsub.f32 %v2575, %v2591
      %v2608 = vsub.f32 %v2576, %v2594
      %v2609 = vsub.f32 %v2577, %v2597
      %v2610 = vsub.f32 %v2578, %v2600
      %v2611 = vsub.f32 %v2579, %v2603
      %v2612 = vmul.f32 %v2604, 1.442695
      %v2613 = vpow.pop %v2612
      %v2614 = vmul.f32 %v2605, 1.442695
      %v2615 = vpow.pop %v2614
      %v2616 = vmul.f32 %v2606, 1.442695
      %v2617 = vpow.pop %v2616
      %v2618 = vmul.f32 %v2607, 1.442695
      %v2619 = vpow.pop %v2618
      %v2620 = vmul.f32 %v2608, 1.442695
      %v2621 = vpow.pop %v2620
      %v2622 = vmul.f32 %v2609, 1.442695
      %v2623 = vpow.pop %v2622
      %v2624 = vmul.f32 %v2610, 1.442695
      %v2625 = vpow.pop %v2624
      %v2626 = vmul.f32 %v2611, 1.442695
      %v2627 = vpow.pop %v2626
      %v2628 = vsel %vm927, %v2613, 0.0
      %2629 = vadd.xlane.f32.xlu0 %v2628
      %v2630 = vpop.xlane.xlu0 %2629
      %v2631 = vsel %vm927, %v2615, 0.0
      %2632 = vadd.xlane.f32.xlu0 %v2631
      %v2633 = vpop.xlane.xlu0 %2632
      %v2634 = vsel %vm927, %v2617, 0.0
      %2635 = vadd.xlane.f32.xlu0 %v2634
      %v2636 = vpop.xlane.xlu0 %2635
      %v2637 = vsel %vm927, %v2619, 0.0
      %2638 = vadd.xlane.f32.xlu0 %v2637
      %v2639 = vpop.xlane.xlu0 %2638
      %v2640 = vsel %vm927, %v2621, 0.0
      %2641 = vadd.xlane.f32.xlu0 %v2640
      %v2642 = vpop.xlane.xlu0 %2641
      %v2643 = vsel %vm927, %v2623, 0.0
      %2644 = vadd.xlane.f32.xlu0 %v2643
      %v2645 = vpop.xlane.xlu0 %2644
      %v2646 = vsel %vm927, %v2625, 0.0
      %2647 = vadd.xlane.f32.xlu0 %v2646
      %v2648 = vpop.xlane.xlu0 %2647
      %v2649 = vsel %vm927, %v2627, 0.0
      %2650 = vadd.xlane.f32.xlu0 %v2649
      %v2651 = vpop.xlane.xlu0 %2650
      %v2652 = vrcp.pop %v2630
      %v2653 = vmul.f32 %v2613, %v2652
      %v2654 = vrcp.pop %v2633
      %v2655 = vmul.f32 %v2615, %v2654
      %v2656 = vrcp.pop %v2636
      %v2657 = vmul.f32 %v2617, %v2656
      %v2658 = vrcp.pop %v2639
      %v2659 = vmul.f32 %v2619, %v2658
      %v2660 = vrcp.pop %v2642
      %v2661 = vmul.f32 %v2621, %v2660
      %v2662 = vrcp.pop %v2645
      %v2663 = vmul.f32 %v2623, %v2662
      %v2664 = vrcp.pop %v2648
      %v2665 = vmul.f32 %v2625, %v2664
      %v2666 = vrcp.pop %v2651
      %v2667 = vmul.f32 %v2627, %v2666
      %2668 = vrot.lane.b32.xlu0 %v749, 40
      %v2669 = vpop.permute.xlu0 %2668
      %2670 = vrot.lane.b32.xlu0 %v750, 40
      %v2671 = vpop.permute.xlu0 %2670
      %2672 = vrot.lane.b32.xlu0 %v751, 40
      %v2673 = vpop.permute.xlu0 %2672
      %2674 = vrot.lane.b32.xlu0 %v752, 40
      %v2675 = vpop.permute.xlu0 %2674
      %2676 = vrot.lane.b32.xlu0 %v753, 40
      %v2677 = vpop.permute.xlu0 %2676
      %2678 = vrot.lane.b32.xlu0 %v754, 40
      %v2679 = vpop.permute.xlu0 %2678
      %2680 = vrot.lane.b32.xlu0 %v755, 40
      %v2681 = vpop.permute.xlu0 %2680
      %2682 = vrot.lane.b32.xlu0 %v756, 40
      %v2683 = vpop.permute.xlu0 %2682
      %v2693 = vsel %vm927, %v2653, 0
      %v2696 = vsel %vm927, %v2655, 0
      %v2699 = vsel %vm927, %v2657, 0
      %v2702 = vsel %vm927, %v2659, 0
      %v2705 = vsel %vm927, %v2661, 0
      %v2708 = vsel %vm927, %v2663, 0
      %v2711 = vsel %vm927, %v2665, 0
      %v2714 = vsel %vm927, %v2667, 0
      %2716 = vmatprep.subr.mxu0 0.0
      %2717 = vmatpush1.msra.mxu0 %v2669
      %2718 = vmatprep.subr.mxu0 0.0
      %2719 = vmatpush1.msra.mxu0 %v2671
      %2720 = vmatprep.subr.mxu0 0.0
      %2721 = vmatpush1.msra.mxu0 %v2673
      %2722 = vmatprep.subr.mxu0 0.0
      %2723 = vmatpush1.msra.mxu0 %v2675
      %2724 = vmatprep.subr.mxu0 0.0
      %2725 = vmatpush1.msra.mxu0 %v2677
      %2726 = vmatprep.subr.mxu0 0.0
      %2727 = vmatpush1.msra.mxu0 %v2679
      %2728 = vmatprep.subr.mxu0 0.0
      %2729 = vmatpush1.msra.mxu0 %v2681
      %2730 = vmatprep.subr.mxu0 0.0
      %2731 = vmatpush1.msra.mxu0 %v2683
      %2732 = vmatprep.subr.mxu0 0.0
      %2733 = vmatpush1.msra.mxu0 0.0
      %2734 = vmatprep.subr.mxu0 0.0
      %2735 = vmatpush1.msra.mxu0 0.0
      %2736 = vmatprep.subr.mxu0 0.0
      %2737 = vmatpush1.msra.mxu0 0.0
      %2738 = vmatprep.subr.mxu0 0.0
      %2739 = vmatpush1.msra.mxu0 0.0
      %2740 = vmatprep.subr.mxu0 0.0
      %2741 = vmatpush1.msra.mxu0 0.0
      %2742 = vmatprep.subr.mxu0 0.0
      %2743 = vmatpush1.msra.mxu0 0.0
      %2744 = vmatprep.subr.mxu0 0.0
      %2745 = vmatpush1.msra.mxu0 0.0
      %2746 = vmatprep.subr.mxu0 0.0
      %2747 = vmatpush1.msra.mxu0 0.0
      %2748 = vmatprep.subr.mxu0 0.0
      %2749 = vmatpush1.msra.mxu0 0.0
      %2750 = vmatprep.subr.mxu0 0.0
      %2751 = vmatpush1.msra.mxu0 0.0
      %2752 = vmatprep.subr.mxu0 0.0
      %2753 = vmatpush1.msra.mxu0 0.0
      %2754 = vmatprep.subr.mxu0 0.0
      %2755 = vmatpush1.msra.mxu0 0.0
      %2756 = vmatprep.subr.mxu0 0.0
      %2757 = vmatpush1.msra.mxu0 0.0
      %2758 = vmatprep.subr.mxu0 0.0
      %2759 = vmatpush1.msra.mxu0 0.0
      %2760 = vmatprep.subr.mxu0 0.0
      %2761 = vmatpush1.msra.mxu0 0.0
      %2762 = vmatprep.subr.mxu0 0.0
      %2763 = vmatpush1.msra.mxu0 0.0
      %2764 = vmatprep.subr.mxu0 0.0
      %2765 = vmatpush1.msra.mxu0 0.0
      %2766 = vmatprep.subr.mxu0 0.0
      %2767 = vmatpush1.msra.mxu0 0.0
      %2768 = vmatprep.subr.mxu0 0.0
      %2769 = vmatpush1.msra.mxu0 0.0
      %2770 = vmatprep.subr.mxu0 0.0
      %2771 = vmatpush1.msra.mxu0 0.0
      %2772 = vmatprep.subr.mxu0 0.0
      %2773 = vmatpush1.msra.mxu0 0.0
      %2774 = vmatprep.subr.mxu0 0.0
      %2775 = vmatpush1.msra.mxu0 0.0
      %2776 = vmatprep.subr.mxu0 0.0
      %2777 = vmatpush1.msra.mxu0 0.0
      %2778 = vmatprep.subr.mxu0 0.0
      %2779 = vmatpush1.msra.mxu0 0.0
      %2780 = vmatprep.mubr.f32.mxu0 0.0
      %2781 = vmatmul.mubr.f32.gmra.mrb[0].mxu0 %v2693
      %v2782 = vpop.f32.mrb[0].mxu0
      %v2783 = vadd.f32 0.0, %v2782
      %v2784 = vpop.f32.mrb[0].mxu0
      %2785 = vmatprep.mubr.f32.mxu0 0.0
      %2786 = vmatmul.mubr.f32.gmra.mrb[0].mxu0 %v2696
      %v2787 = vpop.f32.mrb[0].mxu0
      %v2788 = vadd.f32 0.0, %v2787
      %v2789 = vpop.f32.mrb[0].mxu0
      %2790 = vmatprep.mubr.f32.mxu0 0.0
      %2791 = vmatmul.mubr.f32.gmra.mrb[0].mxu0 %v2699
      %v2792 = vpop.f32.mrb[0].mxu0
      %v2793 = vadd.f32 0.0, %v2792
      %v2794 = vpop.f32.mrb[0].mxu0
      %2795 = vmatprep.mubr.f32.mxu0 0.0
      %2796 = vmatmul.mubr.f32.gmra.mrb[0].mxu0 %v2702
      %v2797 = vpop.f32.mrb[0].mxu0
      %v2798 = vadd.f32 0.0, %v2797
      %v2799 = vpop.f32.mrb[0].mxu0
      %2800 = vmatprep.mubr.f32.mxu0 0.0
      %2801 = vmatmul.mubr.f32.gmra.mrb[0].mxu0 %v2705
      %v2802 = vpop.f32.mrb[0].mxu0
      %v2803 = vadd.f32 0.0, %v2802
      %v2804 = vpop.f32.mrb[0].mxu0
      %2805 = vmatprep.mubr.f32.mxu0 0.0
      %2806 = vmatmul.mubr.f32.gmra.mrb[0].mxu0 %v2708
      %v2807 = vpop.f32.mrb[0].mxu0
      %v2808 = vadd.f32 0.0, %v2807
      %v2809 = vpop.f32.mrb[0].mxu0
      %2810 = vmatprep.mubr.f32.mxu0 0.0
      %2811 = vmatmul.mubr.f32.gmra.mrb[0].mxu0 %v2711
      %v2812 = vpop.f32.mrb[0].mxu0
      %v2813 = vadd.f32 0.0, %v2812
      %v2814 = vpop.f32.mrb[0].mxu0
      %2815 = vmatprep.mubr.f32.mxu0 0.0
      %2816 = vmatmul.mubr.f32.gmra.mrb[0].mxu0 %v2714
      %v2817 = vpop.f32.mrb[0].mxu0
      %v2818 = vadd.f32 0.0, %v2817
      %v2819 = vpop.f32.mrb[0].mxu0
      %2820 = vdwg.mxu0
      %v2821 = vld [vmem:[%s6 + $0x18] sm:$0xff]
      %v2823 = vsel %vm781, %v2783, 0
      %v2826 = vsel %vm781, %v2788, 0
      %v2829 = vsel %vm781, %v2793, 0
      %v2832 = vsel %vm781, %v2798, 0
      %v2835 = vsel %vm781, %v2803, 0
      %v2838 = vsel %vm781, %v2808, 0
      %v2841 = vsel %vm781, %v2813, 0
      %v2844 = vsel %vm781, %v2818, 0
      %2846 = vmatprep.subr.mxu0 0.0
      %2847 = vmatpush1.msra.mxu0 %v2821
      %2848 = vmatprep.subr.mxu0 0.0
      %2849 = vmatpush1.msra.mxu0 0.0
      %2850 = vmatprep.subr.mxu0 0.0
      %2851 = vmatpush1.msra.mxu0 0.0
      %2852 = vmatprep.subr.mxu0 0.0
      %2853 = vmatpush1.msra.mxu0 0.0
      %2854 = vmatprep.subr.mxu0 0.0
      %2855 = vmatpush1.msra.mxu0 0.0
      %2856 = vmatprep.subr.mxu0 0.0
      %2857 = vmatpush1.msra.mxu0 0.0
      %2858 = vmatprep.subr.mxu0 0.0
      %2859 = vmatpush1.msra.mxu0 0.0
      %2860 = vmatprep.subr.mxu0 0.0
      %2861 = vmatpush1.msra.mxu0 0.0
      %2862 = vmatprep.subr.mxu0 0.0
      %2863 = vmatpush1.msra.mxu0 0.0
      %2864 = vmatprep.subr.mxu0 0.0
      %2865 = vmatpush1.msra.mxu0 0.0
      %2866 = vmatprep.subr.mxu0 0.0
      %2867 = vmatpush1.msra.mxu0 0.0
      %2868 = vmatprep.subr.mxu0 0.0
      %2869 = vmatpush1.msra.mxu0 0.0
      %2870 = vmatprep.subr.mxu0 0.0
      %2871 = vmatpush1.msra.mxu0 0.0
      %2872 = vmatprep.subr.mxu0 0.0
      %2873 = vmatpush1.msra.mxu0 0.0
      %2874 = vmatprep.subr.mxu0 0.0
      %2875 = vmatpush1.msra.mxu0 0.0
      %2876 = vmatprep.subr.mxu0 0.0
      %2877 = vmatpush1.msra.mxu0 0.0
      %2878 = vmatprep.subr.mxu0 0.0
      %2879 = vmatpush1.msra.mxu0 0.0
      %2880 = vmatprep.subr.mxu0 0.0
      %2881 = vmatpush1.msra.mxu0 0.0
      %2882 = vmatprep.subr.mxu0 0.0
      %2883 = vmatpush1.msra.mxu0 0.0
      %2884 = vmatprep.subr.mxu0 0.0
      %2885 = vmatpush1.msra.mxu0 0.0
      %2886 = vmatprep.subr.mxu0 0.0
      %2887 = vmatpush1.msra.mxu0 0.0
      %2888 = vmatprep.subr.mxu0 0.0
      %2889 = vmatpush1.msra.mxu0 0.0
      %2890 = vmatprep.subr.mxu0 0.0
      %2891 = vmatpush1.msra.mxu0 0.0
      %2892 = vmatprep.subr.mxu0 0.0
      %2893 = vmatpush1.msra.mxu0 0.0
      %2894 = vmatprep.subr.mxu0 0.0
      %2895 = vmatpush1.msra.mxu0 0.0
      %2896 = vmatprep.subr.mxu0 0.0
      %2897 = vmatpush1.msra.mxu0 0.0
      %2898 = vmatprep.subr.mxu0 0.0
      %2899 = vmatpush1.msra.mxu0 0.0
      %2900 = vmatprep.subr.mxu0 0.0
      %2901 = vmatpush1.msra.mxu0 0.0
      %2902 = vmatprep.subr.mxu0 0.0
      %2903 = vmatpush1.msra.mxu0 0.0
      %2904 = vmatprep.subr.mxu0 0.0
      %2905 = vmatpush1.msra.mxu0 0.0
      %2906 = vmatprep.subr.mxu0 0.0
      %2907 = vmatpush1.msra.mxu0 0.0
      %2908 = vmatprep.subr.mxu0 0.0
      %2909 = vmatpush1.msra.mxu0 0.0
      %2910 = vmatprep.mubr.f32.mxu0 0.0
      %2911 = vmatmul.mubr.f32.gmra.mrb[0].mxu0 %v2823
      %v2912 = vpop.f32.mrb[0].mxu0
      %v2913 = vadd.f32 0.0, %v2912
      %v2914 = vpop.f32.mrb[0].mxu0
      %2915 = vmatprep.mubr.f32.mxu0 0.0
      %2916 = vmatmul.mubr.f32.gmra.mrb[0].mxu0 %v2826
      %v2917 = vpop.f32.mrb[0].mxu0
      %v2918 = vadd.f32 0.0, %v2917
      %v2919 = vpop.f32.mrb[0].mxu0
      %2920 = vmatprep.mubr.f32.mxu0 0.0
      %2921 = vmatmul.mubr.f32.gmra.mrb[0].mxu0 %v2829
      %v2922 = vpop.f32.mrb[0].mxu0
      %v2923 = vadd.f32 0.0, %v2922
      %v2924 = vpop.f32.mrb[0].mxu0
      %2925 = vmatprep.mubr.f32.mxu0 0.0
      %2926 = vmatmul.mubr.f32.gmra.mrb[0].mxu0 %v2832
      %v2927 = vpop.f32.mrb[0].mxu0
      %v2928 = vadd.f32 0.0, %v2927
      %v2929 = vpop.f32.mrb[0].mxu0
      %2930 = vmatprep.mubr.f32.mxu0 0.0
      %2931 = vmatmul.mubr.f32.gmra.mrb[0].mxu0 %v2835
      %v2932 = vpop.f32.mrb[0].mxu0
      %v2933 = vadd.f32 0.0, %v2932
      %v2934 = vpop.f32.mrb[0].mxu0
      %2935 = vmatprep.mubr.f32.mxu0 0.0
      %2936 = vmatmul.mubr.f32.gmra.mrb[0].mxu0 %v2838
      %v2937 = vpop.f32.mrb[0].mxu0
      %v2938 = vadd.f32 0.0, %v2937
      %v2939 = vpop.f32.mrb[0].mxu0
      %2940 = vmatprep.mubr.f32.mxu0 0.0
      %2941 = vmatmul.mubr.f32.gmra.mrb[0].mxu0 %v2841
      %v2942 = vpop.f32.mrb[0].mxu0
      %v2943 = vadd.f32 0.0, %v2942
      %v2944 = vpop.f32.mrb[0].mxu0
      %2945 = vmatprep.mubr.f32.mxu0 0.0
      %2946 = vmatmul.mubr.f32.gmra.mrb[0].mxu0 %v2844
      %v2947 = vpop.f32.mrb[0].mxu0
      %v2948 = vadd.f32 0.0, %v2947
      %v2949 = vpop.f32.mrb[0].mxu0
      %2950 = vdwg.mxu0
      %v2951 = vadd.f32 %v2395, %v2913
      %v2952 = vadd.f32 %v2396, %v2918
      %v2953 = vadd.f32 %v2397, %v2923
      %v2954 = vadd.f32 %v2398, %v2928
      %v2955 = vadd.f32 %v2399, %v2933
      %v2956 = vadd.f32 %v2400, %v2938
      %v2957 = vadd.f32 %v2401, %v2943
      %v2958 = vadd.f32 %v2402, %v2948
      %v2959 = vld [vmem:[%s7] sm:$0x1]
      %v2961 = vlaneseq
      %v2962 = vshrl.u32 %v2961, 7
      %v2963 = vsub.s32 0, %v2962
      %v2964 = vrot.slane %v2959, %v2963
      %v2966 = vadd.f32 %v2951, %v2964
      %v2967 = vadd.f32 %v2952, %v2964
      %v2968 = vadd.f32 %v2953, %v2964
      %v2969 = vadd.f32 %v2954, %v2964
      %v2970 = vadd.f32 %v2955, %v2964
      %v2971 = vadd.f32 %v2956, %v2964
      %v2972 = vadd.f32 %v2957, %v2964
      %v2973 = vadd.f32 %v2958, %v2964
      %2974 = vst.msk [vmem:[%s325] sm:$0xff] %vm342, %v2966
      %2975 = vst.msk [vmem:[%s325 + $0x8] sm:$0xff] %vm342, %v2967
      %2976 = vst.msk [vmem:[%s325 + $0x10] sm:$0xff] %vm342, %v2968
      %2977 = vst.msk [vmem:[%s325 + $0x18] sm:$0xff] %vm342, %v2969
      %2978 = vst.msk [vmem:[%s325 + $0x20] sm:$0xff] %vm342, %v2970
      %2979 = vst.msk [vmem:[%s325 + $0x28] sm:$0xff] %vm342, %v2971
      %2980 = vst.msk [vmem:[%s325 + $0x30] sm:$0xff] %vm342, %v2972
      %2981 = vst.msk [vmem:[%s325 + $0x38] sm:$0xff] %vm342, %v2973
      %p2982 = scmp.lt.s32.totalorder %s19, 1
      %s2983 = scalar_select %p2982, %s19, 1
      %s2984 = smul.addr %s2983, 8
      %s2985 = smul.addr %s2984, 8
      %s2986 = scalar_lea.vmem %s8, %s2985
      // Predicated region
      $region53: #{tpu_custom_call.1} parent=51 // pred_check
        %p2987 = pneg %p215
      $region54: #{tpu_custom_call.1} parent=51 // pred_check_branch
        %2989 = sbr.rel (%p2987) target = $region56
      $region55: #{tpu_custom_call.1} parent=51 // pred_region
        _
      $region56: #{tpu_custom_call.1} parent=51 // pred_fallthru
        _
    $region52: #{tpu_custom_call.1} parent=5 // pred_fallthru
      _
    %p2990 = scmp.le.s32.totalorder 2, %s14
    // Predicated region
    $region57: #{tpu_custom_call.1} parent=5 // pred_check
      %p2991 = pneg %p2990
    $region58: #{tpu_custom_call.1} parent=5 // pred_check_branch
      %2993 = sbr.rel (%p2991) target = $region60
    $region59: #{tpu_custom_call.1} parent=5 // pred_region
      %s2994 = ssub.s32 %s14, 2
      // Predicated region
      $region61: #{tpu_custom_call.1} parent=59 // pred_check
        %p2995 = pneg %p221
      $region62: #{tpu_custom_call.1} parent=59 // pred_check_branch
        %2997 = sbr.rel (%p2995) target = $region64
      $region63: #{tpu_custom_call.1} parent=59 // pred_region
        %p2998 = scmp.lt.s32.totalorder %s20, 1
        %s2999 = scalar_select %p2998, %s20, 1
        %s3000 = smul.addr %s2999, 8
        %s3001 = smul.addr %s3000, 8
        %s3002 = scalar_lea.vmem %s8, %s3001
      $region64: #{tpu_custom_call.1} parent=59 // pred_fallthru
        _
    $region60: #{tpu_custom_call.1} parent=5 // pred_fallthru
      _
  $region6: #{tpu_custom_call.1} parent=0 // loop_footer
    %s18 = sadd.s32 1, %s14
  $region7: #{tpu_custom_call.1} parent=0 // loop_footer_branch
    %13 = sbr.rel target = $region3
  $region8: #{tpu_custom_call.1} parent=0 // loop_exit
    _

</llo_original>
